<compile_context>
chip_gen: v6e
topology: v6e:2x2x1
jax: 0.10.0
libtpu: 0.0.40
codegen_flags: <defaults>
</compile_context>

<pallas_src>
import math

import jax
import jax.numpy as jnp
from jax import lax
from jax.experimental import pallas as pl
from jax.experimental.pallas import tpu as pltpu

# ---------------- model hyper-parameters (small synthetic config) ----------------
B = 2              # batch
S = 8              # sequence length
BS = B * S         # flattened rows (s-major: row = s*B + b)
H = 32             # hidden size
NH = 2             # attention heads
DH = H // NH       # head dim
FF = 4 * H         # FFN intermediate size
VOCAB = 100
VOCAB_PAD = 128    # word-embedding table padded to one full lane width
NUM_CLASSES = 5
OUT_PAD = 128      # lane-dense classifier output, sliced to NUM_CLASSES in the wrapper
LN_EPS = 1e-12

assert B & (B - 1) == 0, "in-kernel block-diagonal mask uses `& (B-1)` instead of `% B`"

# ---------------- packed parameter slab: one lane-dense (rows, 128) f32 block ----------------
# (name, rows, cols) — cols <= 128 for every entry.
_SLAB_ENTRIES = (
    ("wemb", VOCAB_PAD, H),
    ("pos", BS, H),
    ("temb", 2, H),
    ("eg", 1, H), ("eb", 1, H),
    ("g1", 1, H), ("b1", 1, H),
    ("g2", 1, H), ("b2", 1, H),
    ("bo", 1, H),
    ("bqkv", 1, 3 * H),
    ("bf1", 1, FF),
    ("bf2", 1, H),
    ("cb1", 1, H),
    ("cb2", 1, OUT_PAD),
    ("wqkv", H, 3 * H),
    ("wo", H, H),
    ("w1", H, FF),
    ("w2", FF, H),
    ("cw1", H, H),
    ("cw2", H, OUT_PAD),
)


def _build_layout():
    layout, row = {}, 0
    for name, r, c in _SLAB_ENTRIES:
        if r >= 8:                           # matrices start on a sublane-tile boundary
            row = ((row + 7) // 8) * 8
        layout[name] = (row, r, c)
        row += r
    return layout, ((row + 7) // 8) * 8


SLAB_LAYOUT, SLAB_ROWS = _build_layout()     # SLAB_ROWS == 448 -> slab is 448x128 f32 (~229 KiB)
SLAB_COLS = 128


def _gelu(x):
    # TODO(synk): PyTorch nn.GELU() default uses the exact erf form; tanh approximation
    # is used here for guaranteed Mosaic lowering (difference ~1e-3).
    c = math.sqrt(2.0 / math.pi)
    return 0.5 * x * (1.0 + jnp.tanh(c * (x + 0.044715 * x * x * x)))


def _layer_norm(x, g, b):
    # single-pass statistics: the two cross-lane reductions are independent (overlap in XLU)
    inv_n = 1.0 / x.shape[-1]
    s1 = jnp.sum(x, axis=-1, keepdims=True)
    s2 = jnp.sum(x * x, axis=-1, keepdims=True)
    mu = s1 * inv_n
    var = s2 * inv_n - mu * mu
    return (x - mu) * lax.rsqrt(var + LN_EPS) * g + b


def _w(ref, name):
    row, r, c = SLAB_LAYOUT[name]
    return ref[row:row + r, 0:c]             # static slice out of the packed slab


# ---------------- fused kernel: embeddings + encoder layer + classifier head ----------------
def model_kernel(tok_ref, mask_ref, w_ref, out_ref):
    # ---- embeddings: word lookup as one-hot matmul, pre-tiled positions, token-type blend ----
    tok = tok_ref[...]                                                     # (BS, 2) int32
    ids = tok[:, 0:1]                                                      # (BS, 1)
    tt = tok[:, 1:2].astype(jnp.float32)                                   # (BS, 1), values in {0,1}
    one_hot = (lax.broadcasted_iota(jnp.int32, (BS, VOCAB_PAD), 1)
               == ids).astype(jnp.float32)                                 # (BS, VOCAB_PAD)
    x = jnp.dot(one_hot, _w(w_ref, "wemb"), preferred_element_type=jnp.float32)  # (BS, H)
    te = _w(w_ref, "temb")                                                 # (2, H)
    x = x + _w(w_ref, "pos") + te[0:1, :] * (1.0 - tt) + te[1:2, :] * tt
    x = _layer_norm(x, _w(w_ref, "eg"), _w(w_ref, "eb"))                   # (BS, H)

    # ---- attention bias: padding keys + cross-batch keys, block mask synthesized in-kernel ----
    keymask = mask_ref[...].astype(jnp.float32)                            # (1, BS)
    rpar = lax.broadcasted_iota(jnp.int32, (BS, BS), 0) & (B - 1)          # batch id of query row
    cpar = lax.broadcasted_iota(jnp.int32, (BS, BS), 1) & (B - 1)          # batch id of key column
    same = (rpar == cpar).astype(jnp.float32)                              # (BS, BS) block-diagonal
    bias = (same * keymask - 1.0) * 1e9                                    # 0 keep / -1e9 mask

    # ---- self-attention over the flattened s-major slab ----
    qkv = (jnp.dot(x, _w(w_ref, "wqkv"), preferred_element_type=jnp.float32)
           + _w(w_ref, "bqkv"))                                            # (BS, 3H), q already /sqrt(DH)
    wo = _w(w_ref, "wo")                                                   # (H, H), rows split per head
    contract_last = (((1,), (1,)), ((), ()))                               # q . k^T without transpose
    attn = jnp.zeros((BS, H), jnp.float32)
    for h in range(NH):                                                    # unrolled, NH = 2
        qh = qkv[:, h * DH:(h + 1) * DH]
        kh = qkv[:, H + h * DH:H + (h + 1) * DH]
        vh = qkv[:, 2 * H + h * DH:2 * H + (h + 1) * DH]
        s = lax.dot_general(qh, kh, contract_last,
                            preferred_element_type=jnp.float32) + bias     # (BS, BS)
        m = jnp.max(s, axis=-1, keepdims=True)
        p = jnp.exp(s - m)
        p = p * pl.reciprocal(jnp.sum(p, axis=-1, keepdims=True), approx=True)
        ctx = jnp.dot(p, vh, preferred_element_type=jnp.float32)           # (BS, DH)
        attn = attn + jnp.dot(ctx, wo[h * DH:(h + 1) * DH, :],
                              preferred_element_type=jnp.float32)          # per-head output proj
    attn = attn + _w(w_ref, "bo")
    x = _layer_norm(x + attn, _w(w_ref, "g1"), _w(w_ref, "b1"))

    # ---- feed forward ----
    hdn = _gelu(jnp.dot(x, _w(w_ref, "w1"), preferred_element_type=jnp.float32) + _w(w_ref, "bf1"))
    ffo = jnp.dot(hdn, _w(w_ref, "w2"), preferred_element_type=jnp.float32) + _w(w_ref, "bf2")
    x = _layer_norm(x + ffo, _w(w_ref, "g2"), _w(w_ref, "b2"))             # (BS, H) last hidden

    # ---- classifier head on CLS rows (s-major => rows [0, B) are the CLS tokens, contiguous) ----
    cls = x[0:B, :]                                                        # (B, H), zero-cost slice
    ch = _gelu(jnp.dot(cls, _w(w_ref, "cw1"), preferred_element_type=jnp.float32)
               + _w(w_ref, "cb1"))                                         # dropout identity in eval
    out_ref[...] = (jnp.dot(ch, _w(w_ref, "cw2"), preferred_element_type=jnp.float32)
                    + _w(w_ref, "cb2"))                                    # (B, OUT_PAD) lane-dense


# ---------------- parameter init (deterministic, synthetic, PyTorch-like layout) ----------------
def init_params(key):
    keys = iter(jax.random.split(key, 32))
    nrm = lambda shape: (0.02 * jax.random.normal(next(keys), shape)).astype(jnp.float32)
    zeros = lambda shape: jnp.zeros(shape, jnp.float32)
    ones = lambda shape: jnp.ones(shape, jnp.float32)
    return {
        # embeddings
        "word_emb": nrm((VOCAB, H)),
        "pos_emb": nrm((16, H)),            # assumes S <= 16
        "type_emb": nrm((2, H)),
        "emb_ln_g": ones((1, H)), "emb_ln_b": zeros((1, H)),
        # attention
        "wq": nrm((H, H)), "bq": zeros((1, H)),
        "wk": nrm((H, H)), "bk": zeros((1, H)),
        "wv": nrm((H, H)), "bv": zeros((1, H)),
        "wo": nrm((H, H)), "bo": zeros((1, H)),
        "ln1_g": ones((1, H)), "ln1_b": zeros((1, H)),
        # FFN
        "w1": nrm((H, FF)), "b1f": zeros((1, FF)),
        "w2f": nrm((FF, H)), "b2f": zeros((1, H)),
        "ln2_g": ones((1, H)), "ln2_b": zeros((1, H)),
        # classifier head
        "cls_w1": nrm((H, H)), "cls_b1": zeros((1, H)),
        "cls_w2": nrm((H, NUM_CLASSES)), "cls_b2": zeros((1, NUM_CLASSES)),
    }


# one-time layout prep (QKV fusion, 1/sqrt(DH) fold, padding, s-major tiling, slab packing)
def prepare_kernel_params(p):
    inv = 1.0 / math.sqrt(DH)
    t = {
        "wemb": jnp.zeros((VOCAB_PAD, H), jnp.float32).at[:VOCAB].set(p["word_emb"]),
        "pos": jnp.repeat(p["pos_emb"][:S], B, axis=0),        # s-major: row = s*B + b
        "temb": p["type_emb"],
        "eg": p["emb_ln_g"], "eb": p["emb_ln_b"],
        "g1": p["ln1_g"], "b1": p["ln1_b"],
        "g2": p["ln2_g"], "b2": p["ln2_b"],
        "bo": p["bo"],
        "bqkv": jnp.concatenate([p["bq"] * inv, p["bk"], p["bv"]], axis=1),
        "bf1": p["b1f"], "bf2": p["b2f"],
        "cb1": p["cls_b1"],
        "cb2": jnp.zeros((1, OUT_PAD), jnp.float32).at[:, :NUM_CLASSES].set(p["cls_b2"]),
        "wqkv": jnp.concatenate([p["wq"] * inv, p["wk"], p["wv"]], axis=1),
        "wo": p["wo"],
        "w1": p["w1"], "w2": p["w2f"],
        "cw1": p["cls_w1"],
        "cw2": jnp.zeros((H, OUT_PAD), jnp.float32).at[:, :NUM_CLASSES].set(p["cls_w2"]),
    }
    slab = jnp.zeros((SLAB_ROWS, SLAB_COLS), jnp.float32)
    for name, r, c in _SLAB_ENTRIES:
        row = SLAB_LAYOUT[name][0]
        slab = slab.at[row:row + r, :c].set(t[name].astype(jnp.float32))
    return slab


@jax.jit
def classification_model_forward(slab, input_ids, attention_mask, token_type_ids):
    # s-major flattening (row = s*B + b) so CLS tokens land in the first B rows
    ids = input_ids.T.reshape(BS, 1).astype(jnp.int32)
    tt = token_type_ids.T.reshape(BS, 1).astype(jnp.int32)
    tok = jnp.concatenate([ids, tt], axis=1)                   # (BS, 2) int32
    mask = attention_mask.T.reshape(1, BS).astype(jnp.int32)   # (1, BS) int32
    vmem = pl.BlockSpec(memory_space=pltpu.MemorySpace.VMEM)   # whole-array, single DMA each
    logits_pad = pl.pallas_call(
        model_kernel,
        out_shape=jax.ShapeDtypeStruct((B, OUT_PAD), jnp.float32),
        in_specs=[vmem, vmem, vmem],
        out_specs=vmem,
    )(tok, mask, slab)
    return logits_pad[:, :NUM_CLASSES]


if __name__ == "__main__":
    key = jax.random.PRNGKey(0)
    pkey, ikey = jax.random.split(key)
    params = init_params(pkey)
    slab = prepare_kernel_params(params)      # one-time layout prep, outside the timed forward

    input_ids = jax.random.randint(ikey, (B, S), 0, VOCAB, dtype=jnp.int32)
    attention_mask = jnp.ones((B, S), jnp.int32).at[1, 6:].set(0)   # second example padded
    token_type_ids = jnp.zeros((B, S), jnp.int32)

    logits = classification_model_forward(slab, input_ids, attention_mask, token_type_ids)
    jax.block_until_ready(logits)
    assert logits.shape == (B, NUM_CLASSES) and logits.dtype == jnp.float32
    print("KERNEL_OK")
</pallas_src>

<mosaic_0001>
module attributes {stable_mosaic.version = 11 : i64} {
  func.func @model_kernel(%arg0: memref<16x2xi32, #tpu.memory_space<vmem>>, %arg1: memref<1x16xi32, #tpu.memory_space<vmem>>, %arg2: memref<448x128xf32, #tpu.memory_space<vmem>>, %arg3: memref<2x128xf32, #tpu.memory_space<vmem>>) attributes {dimension_semantics = [], scalar_prefetch = 0 : i64, scratch_operands = 0 : i64, tpu.core_type = #tpu.core_type<tc>} {
    %c0 = arith.constant 0 : index
    %c0_0 = arith.constant 0 : index
    %0 = vector.load %arg0[%c0, %c0_0] : memref<16x2xi32, #tpu.memory_space<vmem>>, vector<16x2xi32>
    %1 = vector.extract_strided_slice %0 {offsets = [0, 0], sizes = [16, 1], strides = [1, 1]} : vector<16x2xi32> to vector<16x1xi32>
    %2 = vector.extract_strided_slice %0 {offsets = [0, 1], sizes = [16, 1], strides = [1, 1]} : vector<16x2xi32> to vector<16x1xi32>
    %3 = arith.sitofp %2 : vector<16x1xi32> to vector<16x1xf32>
    %4 = tpu.iota {dimensions = array<i32: 1>} : vector<16x128xi32>
    %5 = vector.broadcast %1 : vector<16x1xi32> to vector<16x128xi32>
    %6 = arith.cmpi eq, %4, %5 : vector<16x128xi32>
    %7 = arith.extui %6 : vector<16x128xi1> to vector<16x128xi32>
    %8 = arith.sitofp %7 : vector<16x128xi32> to vector<16x128xf32>
    %c0_1 = arith.constant 0 : index
    %c0_2 = arith.constant 0 : index
    %9 = vector.load %arg2[%c0_1, %c0_2] : memref<448x128xf32, #tpu.memory_space<vmem>>, vector<128x32xf32>
    %cst = arith.constant dense<0.000000e+00> : vector<16x32xf32>
    %10 = tpu.matmul %8, %9, %cst {dimension_numbers = #tpu.dot_dimension_numbers<[1], [0], [0], [1], [0, 0, 1, 1], [], []>} : vector<16x128xf32>, vector<128x32xf32>, vector<16x32xf32> -> vector<16x32xf32>
    %c144 = arith.constant 144 : index
    %c0_3 = arith.constant 0 : index
    %11 = vector.load %arg2[%c144, %c0_3] : memref<448x128xf32, #tpu.memory_space<vmem>>, vector<2x32xf32>
    %c128 = arith.constant 128 : index
    %c0_4 = arith.constant 0 : index
    %12 = vector.load %arg2[%c128, %c0_4] : memref<448x128xf32, #tpu.memory_space<vmem>>, vector<16x32xf32>
    %13 = arith.addf %10, %12 : vector<16x32xf32>
    %14 = vector.extract_strided_slice %11 {offsets = [0, 0], sizes = [1, 32], strides = [1, 1]} : vector<2x32xf32> to vector<1x32xf32>
    %cst_5 = arith.constant 1.000000e+00 : f32
    %15 = vector.broadcast %cst_5 : f32 to vector<16x1xf32>
    %16 = arith.subf %15, %3 : vector<16x1xf32>
    %17 = vector.broadcast %14 : vector<1x32xf32> to vector<16x32xf32>
    %18 = vector.broadcast %16 : vector<16x1xf32> to vector<16x32xf32>
    %19 = arith.mulf %17, %18 : vector<16x32xf32>
    %20 = arith.addf %13, %19 : vector<16x32xf32>
    %21 = vector.extract_strided_slice %11 {offsets = [1, 0], sizes = [1, 32], strides = [1, 1]} : vector<2x32xf32> to vector<1x32xf32>
    %22 = vector.broadcast %21 : vector<1x32xf32> to vector<16x32xf32>
    %23 = vector.broadcast %3 : vector<16x1xf32> to vector<16x32xf32>
    %24 = arith.mulf %22, %23 : vector<16x32xf32>
    %25 = arith.addf %20, %24 : vector<16x32xf32>
    %c146 = arith.constant 146 : index
    %c0_6 = arith.constant 0 : index
    %26 = vector.load %arg2[%c146, %c0_6] : memref<448x128xf32, #tpu.memory_space<vmem>>, vector<1x32xf32>
    %c147 = arith.constant 147 : index
    %c0_7 = arith.constant 0 : index
    %27 = vector.load %arg2[%c147, %c0_7] : memref<448x128xf32, #tpu.memory_space<vmem>>, vector<1x32xf32>
    %cst_8 = arith.constant dense<0.000000e+00> : vector<16xf32>
    %28 = vector.multi_reduction <add>, %25, %cst_8 [1] : vector<16x32xf32> to vector<16xf32>
    %29 = vector.shape_cast %28 : vector<16xf32> to vector<16x1xf32>
    %30 = arith.mulf %25, %25 : vector<16x32xf32>
    %cst_9 = arith.constant dense<0.000000e+00> : vector<16xf32>
    %31 = vector.multi_reduction <add>, %30, %cst_9 [1] : vector<16x32xf32> to vector<16xf32>
    %32 = vector.shape_cast %31 : vector<16xf32> to vector<16x1xf32>
    %cst_10 = arith.constant 3.125000e-02 : f32
    %33 = vector.broadcast %cst_10 : f32 to vector<16x1xf32>
    %34 = arith.mulf %29, %33 : vector<16x1xf32>
    %cst_11 = arith.constant 3.125000e-02 : f32
    %35 = vector.broadcast %cst_11 : f32 to vector<16x1xf32>
    %36 = arith.mulf %32, %35 : vector<16x1xf32>
    %37 = arith.mulf %34, %34 : vector<16x1xf32>
    %38 = arith.subf %36, %37 : vector<16x1xf32>
    %39 = vector.broadcast %34 : vector<16x1xf32> to vector<16x32xf32>
    %40 = arith.subf %25, %39 : vector<16x32xf32>
    %cst_12 = arith.constant 9.99999996E-13 : f32
    %41 = vector.broadcast %cst_12 : f32 to vector<16x1xf32>
    %42 = arith.addf %38, %41 : vector<16x1xf32>
    %43 = math.rsqrt %42 : vector<16x1xf32>
    %44 = vector.broadcast %43 : vector<16x1xf32> to vector<16x32xf32>
    %45 = arith.mulf %40, %44 : vector<16x32xf32>
    %46 = vector.broadcast %26 : vector<1x32xf32> to vector<16x32xf32>
    %47 = arith.mulf %45, %46 : vector<16x32xf32>
    %48 = vector.broadcast %27 : vector<1x32xf32> to vector<16x32xf32>
    %49 = arith.addf %47, %48 : vector<16x32xf32>
    %c0_13 = arith.constant 0 : index
    %c0_14 = arith.constant 0 : index
    %50 = vector.load %arg1[%c0_13, %c0_14] : memref<1x16xi32, #tpu.memory_space<vmem>>, vector<1x16xi32>
    %51 = arith.sitofp %50 : vector<1x16xi32> to vector<1x16xf32>
    %52 = tpu.iota {dimensions = array<i32: 0>} : vector<16x16xi32>
    %c1_i32 = arith.constant 1 : i32
    %53 = vector.broadcast %c1_i32 : i32 to vector<16x16xi32>
    %54 = arith.andi %52, %53 : vector<16x16xi32>
    %55 = tpu.iota {dimensions = array<i32: 1>} : vector<16x16xi32>
    %c1_i32_15 = arith.constant 1 : i32
    %56 = vector.broadcast %c1_i32_15 : i32 to vector<16x16xi32>
    %57 = arith.andi %55, %56 : vector<16x16xi32>
    %58 = arith.cmpi eq, %54, %57 : vector<16x16xi32>
    %59 = arith.extui %58 : vector<16x16xi1> to vector<16x16xi32>
    %60 = arith.sitofp %59 : vector<16x16xi32> to vector<16x16xf32>
    %61 = vector.broadcast %51 : vector<1x16xf32> to vector<16x16xf32>
    %62 = arith.mulf %60, %61 : vector<16x16xf32>
    %cst_16 = arith.constant 1.000000e+00 : f32
    %63 = vector.broadcast %cst_16 : f32 to vector<16x16xf32>
    %64 = arith.subf %62, %63 : vector<16x16xf32>
    %cst_17 = arith.constant 1.000000e+09 : f32
    %65 = vector.broadcast %cst_17 : f32 to vector<16x16xf32>
    %66 = arith.mulf %64, %65 : vector<16x16xf32>
    %c160 = arith.constant 160 : index
    %c0_18 = arith.constant 0 : index
    %67 = vector.load %arg2[%c160, %c0_18] : memref<448x128xf32, #tpu.memory_space<vmem>>, vector<32x96xf32>
    %cst_19 = arith.constant dense<0.000000e+00> : vector<16x96xf32>
    %68 = tpu.matmul %49, %67, %cst_19 {dimension_numbers = #tpu.dot_dimension_numbers<[1], [0], [0], [1], [0, 0, 1, 1], [], []>} : vector<16x32xf32>, vector<32x96xf32>, vector<16x96xf32> -> vector<16x96xf32>
    %c153 = arith.constant 153 : index
    %c0_20 = arith.constant 0 : index
    %69 = vector.load %arg2[%c153, %c0_20] : memref<448x128xf32, #tpu.memory_space<vmem>>, vector<1x96xf32>
    %70 = vector.broadcast %69 : vector<1x96xf32> to vector<16x96xf32>
    %71 = arith.addf %68, %70 : vector<16x96xf32>
    %c192 = arith.constant 192 : index
    %c0_21 = arith.constant 0 : index
    %72 = vector.load %arg2[%c192, %c0_21] : memref<448x128xf32, #tpu.memory_space<vmem>>, vector<32x32xf32>
    %cst_22 = arith.constant 0.000000e+00 : f32
    %73 = vector.broadcast %cst_22 : f32 to vector<16x32xf32>
    %74 = vector.extract_strided_slice %71 {offsets = [0, 0], sizes = [16, 16], strides = [1, 1]} : vector<16x96xf32> to vector<16x16xf32>
    %75 = vector.extract_strided_slice %71 {offsets = [0, 32], sizes = [16, 16], strides = [1, 1]} : vector<16x96xf32> to vector<16x16xf32>
    %76 = vector.extract_strided_slice %71 {offsets = [0, 64], sizes = [16, 16], strides = [1, 1]} : vector<16x96xf32> to vector<16x16xf32>
    %cst_23 = arith.constant dense<0.000000e+00> : vector<16x16xf32>
    %77 = tpu.matmul %74, %75, %cst_23 {dimension_numbers = #tpu.dot_dimension_numbers<[1], [1], [0], [0], [0, 0, 1, 0], [], []>} : vector<16x16xf32>, vector<16x16xf32>, vector<16x16xf32> -> vector<16x16xf32>
    %78 = arith.addf %77, %66 : vector<16x16xf32>
    %cst_24 = arith.constant dense<0xFF800000> : vector<16xf32>
    %79 = vector.multi_reduction <maximumf>, %78, %cst_24 [1] : vector<16x16xf32> to vector<16xf32>
    %80 = vector.shape_cast %79 : vector<16xf32> to vector<16x1xf32>
    %81 = vector.broadcast %80 : vector<16x1xf32> to vector<16x16xf32>
    %82 = arith.subf %78, %81 : vector<16x16xf32>
    %83 = math.exp %82 : vector<16x16xf32>
    %cst_25 = arith.constant dense<0.000000e+00> : vector<16xf32>
    %84 = vector.multi_reduction <add>, %83, %cst_25 [1] : vector<16x16xf32> to vector<16xf32>
    %85 = vector.shape_cast %84 : vector<16xf32> to vector<16x1xf32>
    %86 = tpu.reciprocal %85 {approx = true} : vector<16x1xf32> -> vector<16x1xf32>
    %87 = vector.broadcast %86 : vector<16x1xf32> to vector<16x16xf32>
    %88 = arith.mulf %83, %87 : vector<16x16xf32>
    %cst_26 = arith.constant dense<0.000000e+00> : vector<16x16xf32>
    %89 = tpu.matmul %88, %76, %cst_26 {dimension_numbers = #tpu.dot_dimension_numbers<[1], [0], [0], [1], [0, 0, 1, 1], [], []>} : vector<16x16xf32>, vector<16x16xf32>, vector<16x16xf32> -> vector<16x16xf32>
    %90 = vector.extract_strided_slice %72 {offsets = [0, 0], sizes = [16, 32], strides = [1, 1]} : vector<32x32xf32> to vector<16x32xf32>
    %cst_27 = arith.constant dense<0.000000e+00> : vector<16x32xf32>
    %91 = tpu.matmul %89, %90, %cst_27 {dimension_numbers = #tpu.dot_dimension_numbers<[1], [0], [0], [1], [0, 0, 1, 1], [], []>} : vector<16x16xf32>, vector<16x32xf32>, vector<16x32xf32> -> vector<16x32xf32>
    %92 = arith.addf %73, %91 : vector<16x32xf32>
    %93 = vector.extract_strided_slice %71 {offsets = [0, 16], sizes = [16, 16], strides = [1, 1]} : vector<16x96xf32> to vector<16x16xf32>
    %94 = vector.extract_strided_slice %71 {offsets = [0, 48], sizes = [16, 16], strides = [1, 1]} : vector<16x96xf32> to vector<16x16xf32>
    %95 = vector.extract_strided_slice %71 {offsets = [0, 80], sizes = [16, 16], strides = [1, 1]} : vector<16x96xf32> to vector<16x16xf32>
    %cst_28 = arith.constant dense<0.000000e+00> : vector<16x16xf32>
    %96 = tpu.matmul %93, %94, %cst_28 {dimension_numbers = #tpu.dot_dimension_numbers<[1], [1], [0], [0], [0, 0, 1, 0], [], []>} : vector<16x16xf32>, vector<16x16xf32>, vector<16x16xf32> -> vector<16x16xf32>
    %97 = arith.addf %96, %66 : vector<16x16xf32>
    %cst_29 = arith.constant dense<0xFF800000> : vector<16xf32>
    %98 = vector.multi_reduction <maximumf>, %97, %cst_29 [1] : vector<16x16xf32> to vector<16xf32>
    %99 = vector.shape_cast %98 : vector<16xf32> to vector<16x1xf32>
    %100 = vector.broadcast %99 : vector<16x1xf32> to vector<16x16xf32>
    %101 = arith.subf %97, %100 : vector<16x16xf32>
    %102 = math.exp %101 : vector<16x16xf32>
    %cst_30 = arith.constant dense<0.000000e+00> : vector<16xf32>
    %103 = vector.multi_reduction <add>, %102, %cst_30 [1] : vector<16x16xf32> to vector<16xf32>
    %104 = vector.shape_cast %103 : vector<16xf32> to vector<16x1xf32>
    %105 = tpu.reciprocal %104 {approx = true} : vector<16x1xf32> -> vector<16x1xf32>
    %106 = vector.broadcast %105 : vector<16x1xf32> to vector<16x16xf32>
    %107 = arith.mulf %102, %106 : vector<16x16xf32>
    %cst_31 = arith.constant dense<0.000000e+00> : vector<16x16xf32>
    %108 = tpu.matmul %107, %95, %cst_31 {dimension_numbers = #tpu.dot_dimension_numbers<[1], [0], [0], [1], [0, 0, 1, 1], [], []>} : vector<16x16xf32>, vector<16x16xf32>, vector<16x16xf32> -> vector<16x16xf32>
    %109 = vector.extract_strided_slice %72 {offsets = [16, 0], sizes = [16, 32], strides = [1, 1]} : vector<32x32xf32> to vector<16x32xf32>
    %cst_32 = arith.constant dense<0.000000e+00> : vector<16x32xf32>
    %110 = tpu.matmul %108, %109, %cst_32 {dimension_numbers = #tpu.dot_dimension_numbers<[1], [0], [0], [1], [0, 0, 1, 1], [], []>} : vector<16x16xf32>, vector<16x32xf32>, vector<16x32xf32> -> vector<16x32xf32>
    %111 = arith.addf %92, %110 : vector<16x32xf32>
    %c152 = arith.constant 152 : index
    %c0_33 = arith.constant 0 : index
    %112 = vector.load %arg2[%c152, %c0_33] : memref<448x128xf32, #tpu.memory_space<vmem>>, vector<1x32xf32>
    %113 = vector.broadcast %112 : vector<1x32xf32> to vector<16x32xf32>
    %114 = arith.addf %111, %113 : vector<16x32xf32>
    %115 = arith.addf %49, %114 : vector<16x32xf32>
    %c148 = arith.constant 148 : index
    %c0_34 = arith.constant 0 : index
    %116 = vector.load %arg2[%c148, %c0_34] : memref<448x128xf32, #tpu.memory_space<vmem>>, vector<1x32xf32>
    %c149 = arith.constant 149 : index
    %c0_35 = arith.constant 0 : index
    %117 = vector.load %arg2[%c149, %c0_35] : memref<448x128xf32, #tpu.memory_space<vmem>>, vector<1x32xf32>
    %cst_36 = arith.constant dense<0.000000e+00> : vector<16xf32>
    %118 = vector.multi_reduction <add>, %115, %cst_36 [1] : vector<16x32xf32> to vector<16xf32>
    %119 = vector.shape_cast %118 : vector<16xf32> to vector<16x1xf32>
    %120 = arith.mulf %115, %115 : vector<16x32xf32>
    %cst_37 = arith.constant dense<0.000000e+00> : vector<16xf32>
    %121 = vector.multi_reduction <add>, %120, %cst_37 [1] : vector<16x32xf32> to vector<16xf32>
    %122 = vector.shape_cast %121 : vector<16xf32> to vector<16x1xf32>
    %cst_38 = arith.constant 3.125000e-02 : f32
    %123 = vector.broadcast %cst_38 : f32 to vector<16x1xf32>
    %124 = arith.mulf %119, %123 : vector<16x1xf32>
    %cst_39 = arith.constant 3.125000e-02 : f32
    %125 = vector.broadcast %cst_39 : f32 to vector<16x1xf32>
    %126 = arith.mulf %122, %125 : vector<16x1xf32>
    %127 = arith.mulf %124, %124 : vector<16x1xf32>
    %128 = arith.subf %126, %127 : vector<16x1xf32>
    %129 = vector.broadcast %124 : vector<16x1xf32> to vector<16x32xf32>
    %130 = arith.subf %115, %129 : vector<16x32xf32>
    %cst_40 = arith.constant 9.99999996E-13 : f32
    %131 = vector.broadcast %cst_40 : f32 to vector<16x1xf32>
    %132 = arith.addf %128, %131 : vector<16x1xf32>
    %133 = math.rsqrt %132 : vector<16x1xf32>
    %134 = vector.broadcast %133 : vector<16x1xf32> to vector<16x32xf32>
    %135 = arith.mulf %130, %134 : vector<16x32xf32>
    %136 = vector.broadcast %116 : vector<1x32xf32> to vector<16x32xf32>
    %137 = arith.mulf %135, %136 : vector<16x32xf32>
    %138 = vector.broadcast %117 : vector<1x32xf32> to vector<16x32xf32>
    %139 = arith.addf %137, %138 : vector<16x32xf32>
    %c224 = arith.constant 224 : index
    %c0_41 = arith.constant 0 : index
    %140 = vector.load %arg2[%c224, %c0_41] : memref<448x128xf32, #tpu.memory_space<vmem>>, vector<32x128xf32>
    %cst_42 = arith.constant dense<0.000000e+00> : vector<16x128xf32>
    %141 = tpu.matmul %139, %140, %cst_42 {dimension_numbers = #tpu.dot_dimension_numbers<[1], [0], [0], [1], [0, 0, 1, 1], [], []>} : vector<16x32xf32>, vector<32x128xf32>, vector<16x128xf32> -> vector<16x128xf32>
    %c154 = arith.constant 154 : index
    %c0_43 = arith.constant 0 : index
    %142 = vector.load %arg2[%c154, %c0_43] : memref<448x128xf32, #tpu.memory_space<vmem>>, vector<1x128xf32>
    %143 = vector.broadcast %142 : vector<1x128xf32> to vector<16x128xf32>
    %144 = arith.addf %141, %143 : vector<16x128xf32>
    %cst_44 = arith.constant 5.000000e-01 : f32
    %145 = vector.broadcast %cst_44 : f32 to vector<16x128xf32>
    %146 = arith.mulf %145, %144 : vector<16x128xf32>
    %cst_45 = arith.constant 4.471500e-02 : f32
    %147 = vector.broadcast %cst_45 : f32 to vector<16x128xf32>
    %148 = arith.mulf %147, %144 : vector<16x128xf32>
    %149 = arith.mulf %148, %144 : vector<16x128xf32>
    %150 = arith.mulf %149, %144 : vector<16x128xf32>
    %151 = arith.addf %144, %150 : vector<16x128xf32>
    %cst_46 = arith.constant 0.797884583 : f32
    %152 = vector.broadcast %cst_46 : f32 to vector<16x128xf32>
    %153 = arith.mulf %152, %151 : vector<16x128xf32>
    %154 = math.tanh %153 : vector<16x128xf32>
    %cst_47 = arith.constant 1.000000e+00 : f32
    %155 = vector.broadcast %cst_47 : f32 to vector<16x128xf32>
    %156 = arith.addf %155, %154 : vector<16x128xf32>
    %157 = arith.mulf %146, %156 : vector<16x128xf32>
    %c256 = arith.constant 256 : index
    %c0_48 = arith.constant 0 : index
    %158 = vector.load %arg2[%c256, %c0_48] : memref<448x128xf32, #tpu.memory_space<vmem>>, vector<128x32xf32>
    %cst_49 = arith.constant dense<0.000000e+00> : vector<16x32xf32>
    %159 = tpu.matmul %157, %158, %cst_49 {dimension_numbers = #tpu.dot_dimension_numbers<[1], [0], [0], [1], [0, 0, 1, 1], [], []>} : vector<16x128xf32>, vector<128x32xf32>, vector<16x32xf32> -> vector<16x32xf32>
    %c155 = arith.constant 155 : index
    %c0_50 = arith.constant 0 : index
    %160 = vector.load %arg2[%c155, %c0_50] : memref<448x128xf32, #tpu.memory_space<vmem>>, vector<1x32xf32>
    %161 = vector.broadcast %160 : vector<1x32xf32> to vector<16x32xf32>
    %162 = arith.addf %159, %161 : vector<16x32xf32>
    %163 = arith.addf %139, %162 : vector<16x32xf32>
    %c150 = arith.constant 150 : index
    %c0_51 = arith.constant 0 : index
    %164 = vector.load %arg2[%c150, %c0_51] : memref<448x128xf32, #tpu.memory_space<vmem>>, vector<1x32xf32>
    %c151 = arith.constant 151 : index
    %c0_52 = arith.constant 0 : index
    %165 = vector.load %arg2[%c151, %c0_52] : memref<448x128xf32, #tpu.memory_space<vmem>>, vector<1x32xf32>
    %cst_53 = arith.constant dense<0.000000e+00> : vector<16xf32>
    %166 = vector.multi_reduction <add>, %163, %cst_53 [1] : vector<16x32xf32> to vector<16xf32>
    %167 = vector.shape_cast %166 : vector<16xf32> to vector<16x1xf32>
    %168 = arith.mulf %163, %163 : vector<16x32xf32>
    %cst_54 = arith.constant dense<0.000000e+00> : vector<16xf32>
    %169 = vector.multi_reduction <add>, %168, %cst_54 [1] : vector<16x32xf32> to vector<16xf32>
    %170 = vector.shape_cast %169 : vector<16xf32> to vector<16x1xf32>
    %cst_55 = arith.constant 3.125000e-02 : f32
    %171 = vector.broadcast %cst_55 : f32 to vector<16x1xf32>
    %172 = arith.mulf %167, %171 : vector<16x1xf32>
    %cst_56 = arith.constant 3.125000e-02 : f32
    %173 = vector.broadcast %cst_56 : f32 to vector<16x1xf32>
    %174 = arith.mulf %170, %173 : vector<16x1xf32>
    %175 = arith.mulf %172, %172 : vector<16x1xf32>
    %176 = arith.subf %174, %175 : vector<16x1xf32>
    %177 = vector.broadcast %172 : vector<16x1xf32> to vector<16x32xf32>
    %178 = arith.subf %163, %177 : vector<16x32xf32>
    %cst_57 = arith.constant 9.99999996E-13 : f32
    %179 = vector.broadcast %cst_57 : f32 to vector<16x1xf32>
    %180 = arith.addf %176, %179 : vector<16x1xf32>
    %181 = math.rsqrt %180 : vector<16x1xf32>
    %182 = vector.broadcast %181 : vector<16x1xf32> to vector<16x32xf32>
    %183 = arith.mulf %178, %182 : vector<16x32xf32>
    %184 = vector.broadcast %164 : vector<1x32xf32> to vector<16x32xf32>
    %185 = arith.mulf %183, %184 : vector<16x32xf32>
    %186 = vector.broadcast %165 : vector<1x32xf32> to vector<16x32xf32>
    %187 = arith.addf %185, %186 : vector<16x32xf32>
    %188 = vector.extract_strided_slice %187 {offsets = [0, 0], sizes = [2, 32], strides = [1, 1]} : vector<16x32xf32> to vector<2x32xf32>
    %c384 = arith.constant 384 : index
    %c0_58 = arith.constant 0 : index
    %189 = vector.load %arg2[%c384, %c0_58] : memref<448x128xf32, #tpu.memory_space<vmem>>, vector<32x32xf32>
    %cst_59 = arith.constant dense<0.000000e+00> : vector<2x32xf32>
    %190 = tpu.matmul %188, %189, %cst_59 {dimension_numbers = #tpu.dot_dimension_numbers<[1], [0], [0], [1], [0, 0, 1, 1], [], []>} : vector<2x32xf32>, vector<32x32xf32>, vector<2x32xf32> -> vector<2x32xf32>
    %c156 = arith.constant 156 : index
    %c0_60 = arith.constant 0 : index
    %191 = vector.load %arg2[%c156, %c0_60] : memref<448x128xf32, #tpu.memory_space<vmem>>, vector<1x32xf32>
    %192 = vector.broadcast %191 : vector<1x32xf32> to vector<2x32xf32>
    %193 = arith.addf %190, %192 : vector<2x32xf32>
    %cst_61 = arith.constant 5.000000e-01 : f32
    %194 = vector.broadcast %cst_61 : f32 to vector<2x32xf32>
    %195 = arith.mulf %194, %193 : vector<2x32xf32>
    %cst_62 = arith.constant 4.471500e-02 : f32
    %196 = vector.broadcast %cst_62 : f32 to vector<2x32xf32>
    %197 = arith.mulf %196, %193 : vector<2x32xf32>
    %198 = arith.mulf %197, %193 : vector<2x32xf32>
    %199 = arith.mulf %198, %193 : vector<2x32xf32>
    %200 = arith.addf %193, %199 : vector<2x32xf32>
    %cst_63 = arith.constant 0.797884583 : f32
    %201 = vector.broadcast %cst_63 : f32 to vector<2x32xf32>
    %202 = arith.mulf %201, %200 : vector<2x32xf32>
    %203 = math.tanh %202 : vector<2x32xf32>
    %cst_64 = arith.constant 1.000000e+00 : f32
    %204 = vector.broadcast %cst_64 : f32 to vector<2x32xf32>
    %205 = arith.addf %204, %203 : vector<2x32xf32>
    %206 = arith.mulf %195, %205 : vector<2x32xf32>
    %c416 = arith.constant 416 : index
    %c0_65 = arith.constant 0 : index
    %207 = vector.load %arg2[%c416, %c0_65] : memref<448x128xf32, #tpu.memory_space<vmem>>, vector<32x128xf32>
    %cst_66 = arith.constant dense<0.000000e+00> : vector<2x128xf32>
    %208 = tpu.matmul %206, %207, %cst_66 {dimension_numbers = #tpu.dot_dimension_numbers<[1], [0], [0], [1], [0, 0, 1, 1], [], []>} : vector<2x32xf32>, vector<32x128xf32>, vector<2x128xf32> -> vector<2x128xf32>
    %c157 = arith.constant 157 : index
    %c0_67 = arith.constant 0 : index
    %209 = vector.load %arg2[%c157, %c0_67] : memref<448x128xf32, #tpu.memory_space<vmem>>, vector<1x128xf32>
    %210 = vector.broadcast %209 : vector<1x128xf32> to vector<2x128xf32>
    %211 = arith.addf %208, %210 : vector<2x128xf32>
    %c0_68 = arith.constant 0 : index
    %c0_69 = arith.constant 0 : index
    %212 = vector.load %arg3[%c0_68, %c0_69] : memref<2x128xf32, #tpu.memory_space<vmem>>, vector<2x128xf32>
    tpu.vector_store %arg3[%c0_68, %c0_69], %211 {strides = array<i32>} : memref<2x128xf32, #tpu.memory_space<vmem>>, vector<2x128xf32>,
    return
  }
}

</mosaic_0001>

<llo_original>
// kernel: classification_model_forward.1
$region0: #{classification_model_forward.1}
  #allocation0 [shape = 'u32[]', space=smem, size = 0x4, offset = 0x4, fixed_abs, tag = 'smem constant byte address 0x4 - core index']
  #allocation1 [shape = 'u32[144,128]{1,0:T(1,128)}', space=vmem, size = 0x12000, scoped, tag = 'internal scratch']
  %s0 = inlined_call_operand.vmem [shape: s32[16,2], index: 0, kind: input, shape index: {}]
  %s1 = inlined_call_operand.vmem [shape: s32[1,16], index: 1, kind: input, shape index: {}]
  %s2 = inlined_call_operand.hbm [shape: f32[448,128], index: 2, kind: input, shape index: {}]
  %s3 = inlined_call_operand.hbm [shape: f32[2,128], index: 3, kind: output, shape index: {}]
  %s4 = sld [smem:[#allocation0]]
  $region26: #{classification_model_forward.1} parent=0
    _
  %s6 = ssub.s32 1, %s4
  %s7 = scalar_select 0, %s6, %s4
  $region1: #{classification_model_forward.1} parent=0
    #allocation2 [shape = 'u8[229376]{0}', space=vmem, size = 0x38000, scoped, tag = 'input window, operand 2, single buffered']
    #allocation3 [shape = 's32[1]{0}', space=sflag, size = 0x4, scoped, tag = 'scoped memory for classification_model_forward.1']
    #allocation4 [shape = 's32[1]{0}', space=sflag, size = 0x4, scoped, tag = 'scoped memory for classification_model_forward.1']
    #allocation5 [shape = 'u8[1024]{0}', space=vmem, size = 0x400, scoped, tag = 'output window, operand 0, single buffered']
    %8 = vsyncpa [#allocation3], 0
    %9 = vsyncpa [#allocation4], 0
    // Predicated region
    $region2: #{classification_model_forward.1} parent=1 // pred_check
      _
    $region3: #{classification_model_forward.1} parent=1 // pred_check_branch
      %11 = sbr.rel (0) target = $region5
    $region4: #{classification_model_forward.1} parent=1 // pred_region
      _
    $region5: #{classification_model_forward.1} parent=1 // pred_fallthru
      _
    // Predicated region
    $region6: #{classification_model_forward.1} parent=1 // pred_check
      _
    $region7: #{classification_model_forward.1} parent=1 // pred_check_branch
      %13 = sbr.rel (0) target = $region9
    $region8: #{classification_model_forward.1} parent=1 // pred_region
      _
    $region9: #{classification_model_forward.1} parent=1 // pred_fallthru
      _
    // Predicated region
    $region10: #{classification_model_forward.1} parent=1 // pred_check
      _
    $region11: #{classification_model_forward.1} parent=1 // pred_check_branch
      %15 = sbr.rel (0) target = $region13
    $region12: #{classification_model_forward.1} parent=1 // pred_region
      %s17 = ssub.s32 7168, 7168
      %18 = vsyncadd [#allocation3], %s17
      %s19 = sshll.u32 [#allocation2], 4
      %s20 = int_to_ptr.vmem [resolvable:$true] %s19
      %25 = dma.hbm_to_vmem [thread:$0]  %s2, 7168, %s20, [#allocation3], 128, 128, 8
    $region13: #{classification_model_forward.1} parent=1 // pred_fallthru
      _
    // Predicated region
    $region14: #{classification_model_forward.1} parent=1 // pred_check
      _
    $region15: #{classification_model_forward.1} parent=1 // pred_check_branch
      %27 = sbr.rel (0) target = $region17
    $region16: #{classification_model_forward.1} parent=1 // pred_region
      %28 = dma.done [#allocation3], 7168
    $region17: #{classification_model_forward.1} parent=1 // pred_fallthru
      _
    %v29 = vld [vmem:[%s0] sm:$0xff]
    %v30 = vld [vmem:[%s0 + $0x8] sm:$0xff]
    %v31 = vcvt.s32.f32 %v29
    %v32 = vcvt.s32.f32 %v30
    %v33 = vlaneseq
    %v34 = vand.u32 %v33, 127
    %35 = vset.pattern.permute.xlu0 0
    %36 = vperm.xlu0 %35, %v29
    %v37 = vpop.permute.xlu0 %36
    %38 = vset.pattern.permute.xlu0 0
    %39 = vperm.xlu0 %38, %v30
    %v40 = vpop.permute.xlu0 %39
    %vm41 = vcmp.eq.s32.totalorder %v34, %v37
    %vm42 = vcmp.eq.s32.totalorder %v34, %v40
    %v43 = vsel %vm41, 1, 0
    %v44 = vsel %vm42, 1, 0
    %v45 = vcvt.s32.f32 %v43
    %v46 = vcvt.s32.f32 %v44
    %v47 = vld [vmem:[#allocation2] sm:$0xff]
    %v48 = vld [vmem:[#allocation2 + $0x8] sm:$0xff]
    %v49 = vld [vmem:[#allocation2 + $0x10] sm:$0xff]
    %v50 = vld [vmem:[#allocation2 + $0x18] sm:$0xff]
    %v51 = vld [vmem:[#allocation2 + $0x20] sm:$0xff]
    %v52 = vld [vmem:[#allocation2 + $0x28] sm:$0xff]
    %v53 = vld [vmem:[#allocation2 + $0x30] sm:$0xff]
    %v54 = vld [vmem:[#allocation2 + $0x38] sm:$0xff]
    %v55 = vld [vmem:[#allocation2 + $0x40] sm:$0xff]
    %v56 = vld [vmem:[#allocation2 + $0x48] sm:$0xff]
    %v57 = vld [vmem:[#allocation2 + $0x50] sm:$0xff]
    %v58 = vld [vmem:[#allocation2 + $0x58] sm:$0xff]
    %v59 = vld [vmem:[#allocation2 + $0x60] sm:$0xff]
    %v60 = vld [vmem:[#allocation2 + $0x68] sm:$0xff]
    %v61 = vld [vmem:[#allocation2 + $0x70] sm:$0xff]
    %v62 = vld [vmem:[#allocation2 + $0x78] sm:$0xff]
    %v63 = vld [vmem:[#allocation2 + $0x90] sm:$0x3]
    %v64 = vld [vmem:[#allocation2 + $0x80] sm:$0xff]
    %v65 = vld [vmem:[#allocation2 + $0x88] sm:$0xff]
    %66 = vmatprep.subr.mxu0 0.0
    %67 = vmatpush1.msra.mxu0 %v62
    %68 = vmatprep.subr.mxu0 0.0
    %69 = vmatpush1.msra.mxu0 %v61
    %70 = vmatprep.subr.mxu0 0.0
    %71 = vmatpush1.msra.mxu0 %v60
    %72 = vmatprep.subr.mxu0 0.0
    %73 = vmatpush1.msra.mxu0 %v59
    %74 = vmatprep.subr.mxu0 0.0
    %75 = vmatpush1.msra.mxu0 %v58
    %76 = vmatprep.subr.mxu0 0.0
    %77 = vmatpush1.msra.mxu0 %v57
    %78 = vmatprep.subr.mxu0 0.0
    %79 = vmatpush1.msra.mxu0 %v56
    %80 = vmatprep.subr.mxu0 0.0
    %81 = vmatpush1.msra.mxu0 %v55
    %82 = vmatprep.subr.mxu0 0.0
    %83 = vmatpush1.msra.mxu0 %v54
    %84 = vmatprep.subr.mxu0 0.0
    %85 = vmatpush1.msra.mxu0 %v53
    %86 = vmatprep.subr.mxu0 0.0
    %87 = vmatpush1.msra.mxu0 %v52
    %88 = vmatprep.subr.mxu0 0.0
    %89 = vmatpush1.msra.mxu0 %v51
    %90 = vmatprep.subr.mxu0 0.0
    %91 = vmatpush1.msra.mxu0 %v50
    %92 = vmatprep.subr.mxu0 0.0
    %93 = vmatpush1.msra.mxu0 %v49
    %94 = vmatprep.subr.mxu0 0.0
    %95 = vmatpush1.msra.mxu0 %v48
    %96 = vmatprep.subr.mxu0 0.0
    %97 = vmatpush1.msra.mxu0 %v47
    %98 = vmatprep.subr.mxu0 0.0
    %99 = vmatpush2.msra.mxu0 0.0
    %100 = vmatprep.subr.mxu0 0.0
    %101 = vmatpush2.msra.mxu0 0.0
    %102 = vmatprep.subr.mxu0 0.0
    %103 = vmatpush2.msra.mxu0 0.0
    %104 = vmatprep.subr.mxu0 0.0
    %105 = vmatpush2.msra.mxu0 0.0
    %106 = vmatprep.subr.mxu0 0.0
    %107 = vmatpush2.msra.mxu0 0.0
    %108 = vmatprep.subr.mxu0 0.0
    %109 = vmatpush2.msra.mxu0 0.0
    %110 = vmatprep.subr.mxu0 0.0
    %111 = vmatpush2.msra.mxu0 0.0
    %112 = vmatprep.subr.mxu0 0.0
    %113 = vmatpush2.msra.mxu0 0.0
    %114 = vmatprep.subr.mxu0 0.0
    %115 = vmatpush2.msra.mxu0 0.0
    %116 = vmatprep.subr.mxu0 0.0
    %117 = vmatpush2.msra.mxu0 0.0
    %118 = vmatprep.subr.mxu0 0.0
    %119 = vmatpush2.msra.mxu0 0.0
    %120 = vmatprep.subr.mxu0 0.0
    %121 = vmatpush2.msra.mxu0 0.0
    %122 = vmatprep.subr.mxu0 0.0
    %123 = vmatpush2.msra.mxu0 0.0
    %124 = vmatprep.subr.mxu0 0.0
    %125 = vmatpush2.msra.mxu0 0.0
    %126 = vmatprep.subr.mxu0 0.0
    %127 = vmatpush2.msra.mxu0 0.0
    %128 = vmatprep.subr.mxu0 0.0
    %129 = vmatpush2.msra.mxu0 0.0
    %130 = vmatprep.mubr.f32.mxu0 0.0
    %131 = vmatmul.mubr.f32.gmra.mxu0 %v45
    %v132 = vpop.f32.mrf.mxu0
    %v133 = vadd.f32 %v64, %v132
    %v134 = vpop.f32.mrf.mxu0
    %135 = vmatprep.mubr.f32.mxu0 0.0
    %136 = vmatmul.mubr.f32.gmra.mxu0 %v46
    %v137 = vpop.f32.mrf.mxu0
    %v138 = vadd.f32 %v65, %v137
    %v139 = vpop.f32.mrf.mxu0
    %140 = vdwg.mxu0
    %v141 = vsub.f32 1.0, %v31
    %v142 = vsub.f32 1.0, %v32
    %v143 = vlaneseq
    %v144 = vshrl.u32 %v143, 7
    %v145 = vsub.s32 0, %v144
    %v146 = vrot.slane %v63, %v145
    %148 = vset.pattern.permute.xlu0 1
    %149 = vperm.xlu0 %148, %v141
    %v150 = vpop.permute.xlu0 %149
    %153 = vset.pattern.permute.xlu0 1
    %154 = vperm.xlu0 %153, %v142
    %v155 = vpop.permute.xlu0 %154
    %v157 = vmul.f32 %v146, %v150
    %v158 = vmul.f32 %v146, %v155
    %v159 = vadd.f32 %v133, %v157
    %v160 = vadd.f32 %v138, %v158
    %v161 = vlaneseq
    %v162 = vshrl.u32 %v161, 7
    %v163 = vsub.s32 1, %v162
    %v164 = vrot.slane %v63, %v163
    %166 = vset.pattern.permute.xlu0 1
    %167 = vperm.xlu0 %166, %v31
    %v168 = vpop.permute.xlu0 %167
    %171 = vset.pattern.permute.xlu0 1
    %172 = vperm.xlu0 %171, %v32
    %v173 = vpop.permute.xlu0 %172
    %v175 = vmul.f32 %v164, %v168
    %v176 = vmul.f32 %v164, %v173
    %v177 = vadd.f32 %v159, %v175
    %v178 = vadd.f32 %v160, %v176
    %v179 = vld [vmem:[#allocation2 + $0x92] sm:$0x1]
    %v180 = vld [vmem:[#allocation2 + $0x93] sm:$0x1]
    %vm181 = vcmask 261120
    %v182 = vsel %vm181, %v177, 0.0
    %183 = vadd.xlane.f32.xlu0 %v182
    %v184 = vpop.xlane.xlu0 %183
    %v185 = vsel %vm181, %v178, 0.0
    %186 = vadd.xlane.f32.xlu0 %v185
    %v187 = vpop.xlane.xlu0 %186
    %v188 = vmul.f32 %v177, %v177
    %v189 = vmul.f32 %v178, %v178
    %v190 = vsel %vm181, %v188, 0.0
    %191 = vadd.xlane.f32.xlu0 %v190
    %v192 = vpop.xlane.xlu0 %191
    %v193 = vsel %vm181, %v189, 0.0
    %194 = vadd.xlane.f32.xlu0 %v193
    %v195 = vpop.xlane.xlu0 %194
    %v196 = vmul.f32 %v184, 0.03125
    %v197 = vmul.f32 %v187, 0.03125
    %v198 = vmul.f32 %v192, 0.03125
    %v199 = vmul.f32 %v195, 0.03125
    %v200 = vmul.f32 %v196, %v196
    %v201 = vmul.f32 %v197, %v197
    %v202 = vsub.f32 %v198, %v200
    %v203 = vsub.f32 %v199, %v201
    %v204 = vsub.f32 %v177, %v196
    %v205 = vsub.f32 %v178, %v197
    %v206 = vadd.f32 %v202, 1e-12
    %v207 = vadd.f32 %v203, 1e-12
    %v208 = vrsqrt.pop %v206
    %v209 = vrsqrt.pop %v207
    %v210 = vmul.f32 %v204, %v208
    %v211 = vmul.f32 %v205, %v209
    %v212 = vlaneseq
    %v213 = vshrl.u32 %v212, 7
    %v214 = vsub.s32 0, %v213
    %v215 = vrot.slane %v179, %v214
    %v216 = vmul.f32 %v210, %v215
    %v217 = vmul.f32 %v211, %v215
    %v218 = vlaneseq
    %v219 = vshrl.u32 %v218, 7
    %v220 = vsub.s32 0, %v219
    %v221 = vrot.slane %v180, %v220
    %v222 = vadd.f32 %v216, %v221
    %v223 = vadd.f32 %v217, %v221
    %v224 = vld [vmem:[%s1] sm:$0x1]
    %v225 = vcvt.s32.f32 %v224
    %v226 = vlaneseq
    %v227 = vshrl.u32 %v226, 7
    %v228 = vadd.s32 %v227, 8
    %v229 = vand.u32 %v227, 1
    %v230 = vand.u32 %v228, 1
    %v231 = vand.u32 %v34, 1
    %vm232 = vcmp.eq.s32.totalorder %v229, %v231
    %vm233 = vcmp.eq.s32.totalorder %v230, %v231
    %v234 = vsel %vm232, 1, 0
    %v235 = vsel %vm233, 1, 0
    %v236 = vcvt.s32.f32 %v234
    %v237 = vcvt.s32.f32 %v235
    %v239 = vlaneseq
    %v240 = vshrl.u32 %v239, 7
    %v241 = vsub.s32 0, %v240
    %v242 = vrot.slane %v225, %v241
    %v244 = vmul.f32 %v236, %v242
    %v245 = vmul.f32 %v237, %v242
    %v246 = vsub.f32 %v244, 1.0
    %v247 = vsub.f32 %v245, 1.0
    %v248 = vmul.f32 %v246, 1e+09
    %v249 = vmul.f32 %v247, 1e+09
    %v250 = vld [vmem:[#allocation2 + $0xa0] sm:$0xff]
    %v251 = vld [vmem:[#allocation2 + $0xa8] sm:$0xff]
    %v252 = vld [vmem:[#allocation2 + $0xb0] sm:$0xff]
    %v253 = vld [vmem:[#allocation2 + $0xb8] sm:$0xff]
    %v254 = vld [vmem:[#allocation2 + $0x99] sm:$0x1]
    %v255 = vlaneseq
    %v256 = vshrl.u32 %v255, 7
    %v257 = vsub.s32 0, %v256
    %v258 = vrot.slane %v254, %v257
    %v260 = vsel %vm181, %v222, 0
    %v263 = vsel %vm181, %v223, 0
    %265 = vmatprep.subr.mxu0 0.0
    %266 = vmatpush1.msra.mxu0 0.0
    %267 = vmatprep.subr.mxu0 0.0
    %268 = vmatpush1.msra.mxu0 0.0
    %269 = vmatprep.subr.mxu0 0.0
    %270 = vmatpush1.msra.mxu0 0.0
    %271 = vmatprep.subr.mxu0 0.0
    %272 = vmatpush1.msra.mxu0 0.0
    %273 = vmatprep.subr.mxu0 0.0
    %274 = vmatpush1.msra.mxu0 0.0
    %275 = vmatprep.subr.mxu0 0.0
    %276 = vmatpush1.msra.mxu0 0.0
    %277 = vmatprep.subr.mxu0 0.0
    %278 = vmatpush1.msra.mxu0 0.0
    %279 = vmatprep.subr.mxu0 0.0
    %280 = vmatpush1.msra.mxu0 0.0
    %281 = vmatprep.subr.mxu0 0.0
    %282 = vmatpush1.msra.mxu0 0.0
    %283 = vmatprep.subr.mxu0 0.0
    %284 = vmatpush1.msra.mxu0 0.0
    %285 = vmatprep.subr.mxu0 0.0
    %286 = vmatpush1.msra.mxu0 0.0
    %287 = vmatprep.subr.mxu0 0.0
    %288 = vmatpush1.msra.mxu0 0.0
    %289 = vmatprep.subr.mxu0 0.0
    %290 = vmatpush1.msra.mxu0 %v253
    %291 = vmatprep.subr.mxu0 0.0
    %292 = vmatpush1.msra.mxu0 %v252
    %293 = vmatprep.subr.mxu0 0.0
    %294 = vmatpush1.msra.mxu0 %v251
    %295 = vmatprep.subr.mxu0 0.0
    %296 = vmatpush1.msra.mxu0 %v250
    %297 = vmatprep.subr.mxu0 0.0
    %298 = vmatpush2.msra.mxu0 0.0
    %299 = vmatprep.subr.mxu0 0.0
    %300 = vmatpush2.msra.mxu0 0.0
    %301 = vmatprep.subr.mxu0 0.0
    %302 = vmatpush2.msra.mxu0 0.0
    %303 = vmatprep.subr.mxu0 0.0
    %304 = vmatpush2.msra.mxu0 0.0
    %305 = vmatprep.subr.mxu0 0.0
    %306 = vmatpush2.msra.mxu0 0.0
    %307 = vmatprep.subr.mxu0 0.0
    %308 = vmatpush2.msra.mxu0 0.0
    %309 = vmatprep.subr.mxu0 0.0
    %310 = vmatpush2.msra.mxu0 0.0
    %311 = vmatprep.subr.mxu0 0.0
    %312 = vmatpush2.msra.mxu0 0.0
    %313 = vmatprep.subr.mxu0 0.0
    %314 = vmatpush2.msra.mxu0 0.0
    %315 = vmatprep.subr.mxu0 0.0
    %316 = vmatpush2.msra.mxu0 0.0
    %317 = vmatprep.subr.mxu0 0.0
    %318 = vmatpush2.msra.mxu0 0.0
    %319 = vmatprep.subr.mxu0 0.0
    %320 = vmatpush2.msra.mxu0 0.0
    %321 = vmatprep.subr.mxu0 0.0
    %322 = vmatpush2.msra.mxu0 0.0
    %323 = vmatprep.subr.mxu0 0.0
    %324 = vmatpush2.msra.mxu0 0.0
    %325 = vmatprep.subr.mxu0 0.0
    %326 = vmatpush2.msra.mxu0 0.0
    %327 = vmatprep.subr.mxu0 0.0
    %328 = vmatpush2.msra.mxu0 0.0
    %329 = vmatprep.mubr.f32.mxu0 0.0
    %330 = vmatmul.mubr.f32.gmra.mxu0 %v260
    %v331 = vpop.f32.mrf.mxu0
    %v332 = vadd.f32 %v258, %v331
    %v333 = vpop.f32.mrf.mxu0
    %334 = vmatprep.mubr.f32.mxu0 0.0
    %335 = vmatmul.mubr.f32.gmra.mxu0 %v263
    %v336 = vpop.f32.mrf.mxu0
    %v337 = vadd.f32 %v258, %v336
    %v338 = vpop.f32.mrf.mxu0
    %339 = vdwg.mxu0
    %v340 = vld [vmem:[#allocation2 + $0xc0] sm:$0xff]
    %v341 = vld [vmem:[#allocation2 + $0xc8] sm:$0xff]
    %v342 = vld [vmem:[#allocation2 + $0xd0] sm:$0xff]
    %v343 = vld [vmem:[#allocation2 + $0xd8] sm:$0xff]
    %346 = vrot.lane.b32.xlu0 %v332, 96
    %v347 = vpop.permute.xlu0 %346
    %348 = vrot.lane.b32.xlu0 %v337, 96
    %v349 = vpop.permute.xlu0 %348
    %vm350 = vcmask 130048
    %v351 = vsel %vm350, %v332, 0
    %v353 = vsel %vm350, %v337, 0
    %v355 = vsel %vm350, %v347, 0
    %v357 = vsel %vm350, %v349, 0
    %359 = vmatprep.subr.mxu0 0.0
    %360 = vmatpush1.xpose.msra.mxu0 0.0
    %361 = vmatprep.subr.mxu0 0.0
    %362 = vmatpush1.xpose.msra.mxu0 0.0
    %363 = vmatprep.subr.mxu0 0.0
    %364 = vmatpush1.xpose.msra.mxu0 0.0
    %365 = vmatprep.subr.mxu0 0.0
    %366 = vmatpush1.xpose.msra.mxu0 0.0
    %367 = vmatprep.subr.mxu0 0.0
    %368 = vmatpush1.xpose.msra.mxu0 0.0
    %369 = vmatprep.subr.mxu0 0.0
    %370 = vmatpush1.xpose.msra.mxu0 0.0
    %371 = vmatprep.subr.mxu0 0.0
    %372 = vmatpush1.xpose.msra.mxu0 0.0
    %373 = vmatprep.subr.mxu0 0.0
    %374 = vmatpush1.xpose.msra.mxu0 0.0
    %375 = vmatprep.subr.mxu0 0.0
    %376 = vmatpush1.xpose.msra.mxu0 0.0
    %377 = vmatprep.subr.mxu0 0.0
    %378 = vmatpush1.xpose.msra.mxu0 0.0
    %379 = vmatprep.subr.mxu0 0.0
    %380 = vmatpush1.xpose.msra.mxu0 0.0
    %381 = vmatprep.subr.mxu0 0.0
    %382 = vmatpush1.xpose.msra.mxu0 0.0
    %383 = vmatprep.subr.mxu0 0.0
    %384 = vmatpush1.xpose.msra.mxu0 0.0
    %385 = vmatprep.subr.mxu0 0.0
    %386 = vmatpush1.xpose.msra.mxu0 0.0
    %387 = vmatprep.subr.mxu0 0.0
    %388 = vmatpush1.xpose.msra.mxu0 %v357
    %389 = vmatprep.subr.mxu0 0.0
    %390 = vmatpush1.xpose.msra.mxu0 %v355
    %391 = vmatprep.subr.mxu0 0.0
    %392 = vmatpush2.xpose.msra.mxu0 0.0
    %393 = vmatprep.subr.mxu0 0.0
    %394 = vmatpush2.xpose.msra.mxu0 0.0
    %395 = vmatprep.subr.mxu0 0.0
    %396 = vmatpush2.xpose.msra.mxu0 0.0
    %397 = vmatprep.subr.mxu0 0.0
    %398 = vmatpush2.xpose.msra.mxu0 0.0
    %399 = vmatprep.subr.mxu0 0.0
    %400 = vmatpush2.xpose.msra.mxu0 0.0
    %401 = vmatprep.subr.mxu0 0.0
    %402 = vmatpush2.xpose.msra.mxu0 0.0
    %403 = vmatprep.subr.mxu0 0.0
    %404 = vmatpush2.xpose.msra.mxu0 0.0
    %405 = vmatprep.subr.mxu0 0.0
    %406 = vmatpush2.xpose.msra.mxu0 0.0
    %407 = vmatprep.subr.mxu0 0.0
    %408 = vmatpush2.xpose.msra.mxu0 0.0
    %409 = vmatprep.subr.mxu0 0.0
    %410 = vmatpush2.xpose.msra.mxu0 0.0
    %411 = vmatprep.subr.mxu0 0.0
    %412 = vmatpush2.xpose.msra.mxu0 0.0
    %413 = vmatprep.subr.mxu0 0.0
    %414 = vmatpush2.xpose.msra.mxu0 0.0
    %415 = vmatprep.subr.mxu0 0.0
    %416 = vmatpush2.xpose.msra.mxu0 0.0
    %417 = vmatprep.subr.mxu0 0.0
    %418 = vmatpush2.xpose.msra.mxu0 0.0
    %419 = vmatprep.subr.mxu0 0.0
    %420 = vmatpush2.xpose.msra.mxu0 0.0
    %421 = vmatprep.subr.mxu0 0.0
    %422 = vmatpush2.xpose.msra.mxu0 0.0
    %423 = vmatprep.mubr.f32.mxu0 0.0
    %424 = vmatmul.mubr.f32.gmra.mxu0 %v351
    %v425 = vpop.f32.mrf.mxu0
    %v426 = vadd.f32 %v248, %v425
    %v427 = vpop.f32.mrf.mxu0
    %428 = vmatprep.mubr.f32.mxu0 0.0
    %429 = vmatmul.mubr.f32.gmra.mxu0 %v353
    %v430 = vpop.f32.mrf.mxu0
    %v431 = vadd.f32 %v249, %v430
    %v432 = vpop.f32.mrf.mxu0
    %433 = vdwg.mxu0
    %v434 = vsel %vm350, %v426, -inf
    %435 = vmax.xlane.f32.xlu0 %v434
    %v436 = vpop.xlane.xlu0 %435
    %v437 = vsel %vm350, %v431, -inf
    %438 = vmax.xlane.f32.xlu0 %v437
    %v439 = vpop.xlane.xlu0 %438
    %v440 = vsub.f32 %v426, %v436
    %v441 = vsub.f32 %v431, %v439
    %v442 = vmul.f32 %v440, 1.442695
    %v443 = vpow.pop %v442
    %v444 = vmul.f32 %v441, 1.442695
    %v445 = vpow.pop %v444
    %v446 = vsel %vm350, %v443, 0.0
    %447 = vadd.xlane.f32.xlu0 %v446
    %v448 = vpop.xlane.xlu0 %447
    %v449 = vsel %vm350, %v445, 0.0
    %450 = vadd.xlane.f32.xlu0 %v449
    %v451 = vpop.xlane.xlu0 %450
    %v452 = vrcp.pop %v448
    %v453 = vrcp.pop %v451
    %v454 = vmul.f32 %v443, %v452
    %v455 = vmul.f32 %v445, %v453
    %456 = vrot.lane.b32.xlu0 %v332, 64
    %v457 = vpop.permute.xlu0 %456
    %458 = vrot.lane.b32.xlu0 %v337, 64
    %v459 = vpop.permute.xlu0 %458
    %v463 = vsel %vm350, %v454, 0
    %v466 = vsel %vm350, %v455, 0
    %468 = vmatprep.subr.mxu0 0.0
    %469 = vmatpush1.msra.mxu0 0.0
    %470 = vmatprep.subr.mxu0 0.0
    %471 = vmatpush1.msra.mxu0 0.0
    %472 = vmatprep.subr.mxu0 0.0
    %473 = vmatpush1.msra.mxu0 0.0
    %474 = vmatprep.subr.mxu0 0.0
    %475 = vmatpush1.msra.mxu0 0.0
    %476 = vmatprep.subr.mxu0 0.0
    %477 = vmatpush1.msra.mxu0 0.0
    %478 = vmatprep.subr.mxu0 0.0
    %479 = vmatpush1.msra.mxu0 0.0
    %480 = vmatprep.subr.mxu0 0.0
    %481 = vmatpush1.msra.mxu0 0.0
    %482 = vmatprep.subr.mxu0 0.0
    %483 = vmatpush1.msra.mxu0 0.0
    %484 = vmatprep.subr.mxu0 0.0
    %485 = vmatpush1.msra.mxu0 0.0
    %486 = vmatprep.subr.mxu0 0.0
    %487 = vmatpush1.msra.mxu0 0.0
    %488 = vmatprep.subr.mxu0 0.0
    %489 = vmatpush1.msra.mxu0 0.0
    %490 = vmatprep.subr.mxu0 0.0
    %491 = vmatpush1.msra.mxu0 0.0
    %492 = vmatprep.subr.mxu0 0.0
    %493 = vmatpush1.msra.mxu0 0.0
    %494 = vmatprep.subr.mxu0 0.0
    %495 = vmatpush1.msra.mxu0 0.0
    %496 = vmatprep.subr.mxu0 0.0
    %497 = vmatpush1.msra.mxu0 %v459
    %498 = vmatprep.subr.mxu0 0.0
    %499 = vmatpush1.msra.mxu0 %v457
    %500 = vmatprep.subr.mxu0 0.0
    %501 = vmatpush2.msra.mxu0 0.0
    %502 = vmatprep.subr.mxu0 0.0
    %503 = vmatpush2.msra.mxu0 0.0
    %504 = vmatprep.subr.mxu0 0.0
    %505 = vmatpush2.msra.mxu0 0.0
    %506 = vmatprep.subr.mxu0 0.0
    %507 = vmatpush2.msra.mxu0 0.0
    %508 = vmatprep.subr.mxu0 0.0
    %509 = vmatpush2.msra.mxu0 0.0
    %510 = vmatprep.subr.mxu0 0.0
    %511 = vmatpush2.msra.mxu0 0.0
    %512 = vmatprep.subr.mxu0 0.0
    %513 = vmatpush2.msra.mxu0 0.0
    %514 = vmatprep.subr.mxu0 0.0
    %515 = vmatpush2.msra.mxu0 0.0
    %516 = vmatprep.subr.mxu0 0.0
    %517 = vmatpush2.msra.mxu0 0.0
    %518 = vmatprep.subr.mxu0 0.0
    %519 = vmatpush2.msra.mxu0 0.0
    %520 = vmatprep.subr.mxu0 0.0
    %521 = vmatpush2.msra.mxu0 0.0
    %522 = vmatprep.subr.mxu0 0.0
    %523 = vmatpush2.msra.mxu0 0.0
    %524 = vmatprep.subr.mxu0 0.0
    %525 = vmatpush2.msra.mxu0 0.0
    %526 = vmatprep.subr.mxu0 0.0
    %527 = vmatpush2.msra.mxu0 0.0
    %528 = vmatprep.subr.mxu0 0.0
    %529 = vmatpush2.msra.mxu0 0.0
    %530 = vmatprep.subr.mxu0 0.0
    %531 = vmatpush2.msra.mxu0 0.0
    %532 = vmatprep.mubr.f32.mxu0 0.0
    %533 = vmatmul.mubr.f32.gmra.mxu0 %v463
    %v534 = vpop.f32.mrf.mxu0
    %v535 = vadd.f32 0.0, %v534
    %v536 = vpop.f32.mrf.mxu0
    %537 = vmatprep.mubr.f32.mxu0 0.0
    %538 = vmatmul.mubr.f32.gmra.mxu0 %v466
    %v539 = vpop.f32.mrf.mxu0
    %v540 = vadd.f32 0.0, %v539
    %v541 = vpop.f32.mrf.mxu0
    %542 = vdwg.mxu0
    %543 = vrot.lane.b32.xlu0 %v332, 112
    %v544 = vpop.permute.xlu0 %543
    %545 = vrot.lane.b32.xlu0 %v337, 112
    %v546 = vpop.permute.xlu0 %545
    %547 = vrot.lane.b32.xlu0 %v332, 80
    %v548 = vpop.permute.xlu0 %547
    %549 = vrot.lane.b32.xlu0 %v337, 80
    %v550 = vpop.permute.xlu0 %549
    %v551 = vsel %vm350, %v544, 0
    %v553 = vsel %vm350, %v546, 0
    %v555 = vsel %vm350, %v548, 0
    %v557 = vsel %vm350, %v550, 0
    %559 = vmatprep.subr.mxu0 0.0
    %560 = vmatpush1.xpose.msra.mxu0 0.0
    %561 = vmatprep.subr.mxu0 0.0
    %562 = vmatpush1.xpose.msra.mxu0 0.0
    %563 = vmatprep.subr.mxu0 0.0
    %564 = vmatpush1.xpose.msra.mxu0 0.0
    %565 = vmatprep.subr.mxu0 0.0
    %566 = vmatpush1.xpose.msra.mxu0 0.0
    %567 = vmatprep.subr.mxu0 0.0
    %568 = vmatpush1.xpose.msra.mxu0 0.0
    %569 = vmatprep.subr.mxu0 0.0
    %570 = vmatpush1.xpose.msra.mxu0 0.0
    %571 = vmatprep.subr.mxu0 0.0
    %572 = vmatpush1.xpose.msra.mxu0 0.0
    %573 = vmatprep.subr.mxu0 0.0
    %574 = vmatpush1.xpose.msra.mxu0 0.0
    %575 = vmatprep.subr.mxu0 0.0
    %576 = vmatpush1.xpose.msra.mxu0 0.0
    %577 = vmatprep.subr.mxu0 0.0
    %578 = vmatpush1.xpose.msra.mxu0 0.0
    %579 = vmatprep.subr.mxu0 0.0
    %580 = vmatpush1.xpose.msra.mxu0 0.0
    %581 = vmatprep.subr.mxu0 0.0
    %582 = vmatpush1.xpose.msra.mxu0 0.0
    %583 = vmatprep.subr.mxu0 0.0
    %584 = vmatpush1.xpose.msra.mxu0 0.0
    %585 = vmatprep.subr.mxu0 0.0
    %586 = vmatpush1.xpose.msra.mxu0 0.0
    %587 = vmatprep.subr.mxu0 0.0
    %588 = vmatpush1.xpose.msra.mxu0 %v557
    %589 = vmatprep.subr.mxu0 0.0
    %590 = vmatpush1.xpose.msra.mxu0 %v555
    %591 = vmatprep.subr.mxu0 0.0
    %592 = vmatpush2.xpose.msra.mxu0 0.0
    %593 = vmatprep.subr.mxu0 0.0
    %594 = vmatpush2.xpose.msra.mxu0 0.0
    %595 = vmatprep.subr.mxu0 0.0
    %596 = vmatpush2.xpose.msra.mxu0 0.0
    %597 = vmatprep.subr.mxu0 0.0
    %598 = vmatpush2.xpose.msra.mxu0 0.0
    %599 = vmatprep.subr.mxu0 0.0
    %600 = vmatpush2.xpose.msra.mxu0 0.0
    %601 = vmatprep.subr.mxu0 0.0
    %602 = vmatpush2.xpose.msra.mxu0 0.0
    %603 = vmatprep.subr.mxu0 0.0
    %604 = vmatpush2.xpose.msra.mxu0 0.0
    %605 = vmatprep.subr.mxu0 0.0
    %606 = vmatpush2.xpose.msra.mxu0 0.0
    %607 = vmatprep.subr.mxu0 0.0
    %608 = vmatpush2.xpose.msra.mxu0 0.0
    %609 = vmatprep.subr.mxu0 0.0
    %610 = vmatpush2.xpose.msra.mxu0 0.0
    %611 = vmatprep.subr.mxu0 0.0
    %612 = vmatpush2.xpose.msra.mxu0 0.0
    %613 = vmatprep.subr.mxu0 0.0
    %614 = vmatpush2.xpose.msra.mxu0 0.0
    %615 = vmatprep.subr.mxu0 0.0
    %616 = vmatpush2.xpose.msra.mxu0 0.0
    %617 = vmatprep.subr.mxu0 0.0
    %618 = vmatpush2.xpose.msra.mxu0 0.0
    %619 = vmatprep.subr.mxu0 0.0
    %620 = vmatpush2.xpose.msra.mxu0 0.0
    %621 = vmatprep.subr.mxu0 0.0
    %622 = vmatpush2.xpose.msra.mxu0 0.0
    %623 = vmatprep.mubr.f32.mxu0 0.0
    %624 = vmatmul.mubr.f32.gmra.mxu0 %v551
    %v625 = vpop.f32.mrf.mxu0
    %v626 = vadd.f32 %v248, %v625
    %v627 = vpop.f32.mrf.mxu0
    %628 = vmatprep.mubr.f32.mxu0 0.0
    %629 = vmatmul.mubr.f32.gmra.mxu0 %v553
    %v630 = vpop.f32.mrf.mxu0
    %v631 = vadd.f32 %v249, %v630
    %v632 = vpop.f32.mrf.mxu0
    %633 = vdwg.mxu0
    %v634 = vsel %vm350, %v626, -inf
    %635 = vmax.xlane.f32.xlu0 %v634
    %v636 = vpop.xlane.xlu0 %635
    %v637 = vsel %vm350, %v631, -inf
    %638 = vmax.xlane.f32.xlu0 %v637
    %v639 = vpop.xlane.xlu0 %638
    %v640 = vsub.f32 %v626, %v636
    %v641 = vsub.f32 %v631, %v639
    %v642 = vmul.f32 %v640, 1.442695
    %v643 = vpow.pop %v642
    %v644 = vmul.f32 %v641, 1.442695
    %v645 = vpow.pop %v644
    %v646 = vsel %vm350, %v643, 0.0
    %647 = vadd.xlane.f32.xlu0 %v646
    %v648 = vpop.xlane.xlu0 %647
    %v649 = vsel %vm350, %v645, 0.0
    %650 = vadd.xlane.f32.xlu0 %v649
    %v651 = vpop.xlane.xlu0 %650
    %v652 = vrcp.pop %v648
    %v653 = vrcp.pop %v651
    %v654 = vmul.f32 %v643, %v652
    %v655 = vmul.f32 %v645, %v653
    %656 = vrot.lane.b32.xlu0 %v332, 48
    %v657 = vpop.permute.xlu0 %656
    %658 = vrot.lane.b32.xlu0 %v337, 48
    %v659 = vpop.permute.xlu0 %658
    %v663 = vsel %vm350, %v654, 0
    %v666 = vsel %vm350, %v655, 0
    %668 = vmatprep.subr.mxu0 0.0
    %669 = vmatpush1.msra.mxu0 0.0
    %670 = vmatprep.subr.mxu0 0.0
    %671 = vmatpush1.msra.mxu0 0.0
    %672 = vmatprep.subr.mxu0 0.0
    %673 = vmatpush1.msra.mxu0 0.0
    %674 = vmatprep.subr.mxu0 0.0
    %675 = vmatpush1.msra.mxu0 0.0
    %676 = vmatprep.subr.mxu0 0.0
    %677 = vmatpush1.msra.mxu0 0.0
    %678 = vmatprep.subr.mxu0 0.0
    %679 = vmatpush1.msra.mxu0 0.0
    %680 = vmatprep.subr.mxu0 0.0
    %681 = vmatpush1.msra.mxu0 0.0
    %682 = vmatprep.subr.mxu0 0.0
    %683 = vmatpush1.msra.mxu0 0.0
    %684 = vmatprep.subr.mxu0 0.0
    %685 = vmatpush1.msra.mxu0 0.0
    %686 = vmatprep.subr.mxu0 0.0
    %687 = vmatpush1.msra.mxu0 0.0
    %688 = vmatprep.subr.mxu0 0.0
    %689 = vmatpush1.msra.mxu0 0.0
    %690 = vmatprep.subr.mxu0 0.0
    %691 = vmatpush1.msra.mxu0 0.0
    %692 = vmatprep.subr.mxu0 0.0
    %693 = vmatpush1.msra.mxu0 0.0
    %694 = vmatprep.subr.mxu0 0.0
    %695 = vmatpush1.msra.mxu0 0.0
    %696 = vmatprep.subr.mxu0 0.0
    %697 = vmatpush1.msra.mxu0 %v659
    %698 = vmatprep.subr.mxu0 0.0
    %699 = vmatpush1.msra.mxu0 %v657
    %700 = vmatprep.subr.mxu0 0.0
    %701 = vmatpush2.msra.mxu0 0.0
    %702 = vmatprep.subr.mxu0 0.0
    %703 = vmatpush2.msra.mxu0 0.0
    %704 = vmatprep.subr.mxu0 0.0
    %705 = vmatpush2.msra.mxu0 0.0
    %706 = vmatprep.subr.mxu0 0.0
    %707 = vmatpush2.msra.mxu0 0.0
    %708 = vmatprep.subr.mxu0 0.0
    %709 = vmatpush2.msra.mxu0 0.0
    %710 = vmatprep.subr.mxu0 0.0
    %711 = vmatpush2.msra.mxu0 0.0
    %712 = vmatprep.subr.mxu0 0.0
    %713 = vmatpush2.msra.mxu0 0.0
    %714 = vmatprep.subr.mxu0 0.0
    %715 = vmatpush2.msra.mxu0 0.0
    %716 = vmatprep.subr.mxu0 0.0
    %717 = vmatpush2.msra.mxu0 0.0
    %718 = vmatprep.subr.mxu0 0.0
    %719 = vmatpush2.msra.mxu0 0.0
    %720 = vmatprep.subr.mxu0 0.0
    %721 = vmatpush2.msra.mxu0 0.0
    %722 = vmatprep.subr.mxu0 0.0
    %723 = vmatpush2.msra.mxu0 0.0
    %724 = vmatprep.subr.mxu0 0.0
    %725 = vmatpush2.msra.mxu0 0.0
    %726 = vmatprep.subr.mxu0 0.0
    %727 = vmatpush2.msra.mxu0 0.0
    %728 = vmatprep.subr.mxu0 0.0
    %729 = vmatpush2.msra.mxu0 0.0
    %730 = vmatprep.subr.mxu0 0.0
    %731 = vmatpush2.msra.mxu0 0.0
    %732 = vmatprep.mubr.f32.mxu0 0.0
    %733 = vmatmul.mubr.f32.gmra.mxu0 %v663
    %v734 = vpop.f32.mrf.mxu0
    %v735 = vadd.f32 0.0, %v734
    %v736 = vpop.f32.mrf.mxu0
    %737 = vmatprep.mubr.f32.mxu0 0.0
    %738 = vmatmul.mubr.f32.gmra.mxu0 %v666
    %v739 = vpop.f32.mrf.mxu0
    %v740 = vadd.f32 0.0, %v739
    %v741 = vpop.f32.mrf.mxu0
    %742 = vdwg.mxu0
    %v744 = vsel %vm350, %v735, 0
    %v747 = vsel %vm350, %v740, 0
    %749 = vmatprep.subr.mxu0 0.0
    %750 = vmatpush1.msra.mxu0 0.0
    %751 = vmatprep.subr.mxu0 0.0
    %752 = vmatpush1.msra.mxu0 0.0
    %753 = vmatprep.subr.mxu0 0.0
    %754 = vmatpush1.msra.mxu0 0.0
    %755 = vmatprep.subr.mxu0 0.0
    %756 = vmatpush1.msra.mxu0 0.0
    %757 = vmatprep.subr.mxu0 0.0
    %758 = vmatpush1.msra.mxu0 0.0
    %759 = vmatprep.subr.mxu0 0.0
    %760 = vmatpush1.msra.mxu0 0.0
    %761 = vmatprep.subr.mxu0 0.0
    %762 = vmatpush1.msra.mxu0 0.0
    %763 = vmatprep.subr.mxu0 0.0
    %764 = vmatpush1.msra.mxu0 0.0
    %765 = vmatprep.subr.mxu0 0.0
    %766 = vmatpush1.msra.mxu0 0.0
    %767 = vmatprep.subr.mxu0 0.0
    %768 = vmatpush1.msra.mxu0 0.0
    %769 = vmatprep.subr.mxu0 0.0
    %770 = vmatpush1.msra.mxu0 0.0
    %771 = vmatprep.subr.mxu0 0.0
    %772 = vmatpush1.msra.mxu0 0.0
    %773 = vmatprep.subr.mxu0 0.0
    %774 = vmatpush1.msra.mxu0 0.0
    %775 = vmatprep.subr.mxu0 0.0
    %776 = vmatpush1.msra.mxu0 0.0
    %777 = vmatprep.subr.mxu0 0.0
    %778 = vmatpush1.msra.mxu0 %v343
    %779 = vmatprep.subr.mxu0 0.0
    %780 = vmatpush1.msra.mxu0 %v342
    %781 = vmatprep.subr.mxu0 0.0
    %782 = vmatpush2.msra.mxu0 0.0
    %783 = vmatprep.subr.mxu0 0.0
    %784 = vmatpush2.msra.mxu0 0.0
    %785 = vmatprep.subr.mxu0 0.0
    %786 = vmatpush2.msra.mxu0 0.0
    %787 = vmatprep.subr.mxu0 0.0
    %788 = vmatpush2.msra.mxu0 0.0
    %789 = vmatprep.subr.mxu0 0.0
    %790 = vmatpush2.msra.mxu0 0.0
    %791 = vmatprep.subr.mxu0 0.0
    %792 = vmatpush2.msra.mxu0 0.0
    %793 = vmatprep.subr.mxu0 0.0
    %794 = vmatpush2.msra.mxu0 0.0
    %795 = vmatprep.subr.mxu0 0.0
    %796 = vmatpush2.msra.mxu0 0.0
    %797 = vmatprep.subr.mxu0 0.0
    %798 = vmatpush2.msra.mxu0 0.0
    %799 = vmatprep.subr.mxu0 0.0
    %800 = vmatpush2.msra.mxu0 0.0
    %801 = vmatprep.subr.mxu0 0.0
    %802 = vmatpush2.msra.mxu0 0.0
    %803 = vmatprep.subr.mxu0 0.0
    %804 = vmatpush2.msra.mxu0 0.0
    %805 = vmatprep.subr.mxu0 0.0
    %806 = vmatpush2.msra.mxu0 0.0
    %807 = vmatprep.subr.mxu0 0.0
    %808 = vmatpush2.msra.mxu0 0.0
    %809 = vmatprep.subr.mxu0 0.0
    %810 = vmatpush2.msra.mxu0 0.0
    %811 = vmatprep.subr.mxu0 0.0
    %812 = vmatpush2.msra.mxu0 0.0
    %813 = vmatprep.mubr.f32.mxu0 0.0
    %814 = vmatmul.mubr.f32.gmra.mxu0 %v744
    %v815 = vpop.f32.mrf.mxu0
    %v816 = vadd.f32 0.0, %v815
    %v817 = vpop.f32.mrf.mxu0
    %818 = vmatprep.mubr.f32.mxu0 0.0
    %819 = vmatmul.mubr.f32.gmra.mxu0 %v747
    %v820 = vpop.f32.mrf.mxu0
    %v821 = vadd.f32 0.0, %v820
    %v822 = vpop.f32.mrf.mxu0
    %823 = vdwg.mxu0
    %v825 = vsel %vm350, %v535, 0
    %v828 = vsel %vm350, %v540, 0
    %830 = vmatprep.subr.mxu0 0.0
    %831 = vmatpush1.msra.mxu0 0.0
    %832 = vmatprep.subr.mxu0 0.0
    %833 = vmatpush1.msra.mxu0 0.0
    %834 = vmatprep.subr.mxu0 0.0
    %835 = vmatpush1.msra.mxu0 0.0
    %836 = vmatprep.subr.mxu0 0.0
    %837 = vmatpush1.msra.mxu0 0.0
    %838 = vmatprep.subr.mxu0 0.0
    %839 = vmatpush1.msra.mxu0 0.0
    %840 = vmatprep.subr.mxu0 0.0
    %841 = vmatpush1.msra.mxu0 0.0
    %842 = vmatprep.subr.mxu0 0.0
    %843 = vmatpush1.msra.mxu0 0.0
    %844 = vmatprep.subr.mxu0 0.0
    %845 = vmatpush1.msra.mxu0 0.0
    %846 = vmatprep.subr.mxu0 0.0
    %847 = vmatpush1.msra.mxu0 0.0
    %848 = vmatprep.subr.mxu0 0.0
    %849 = vmatpush1.msra.mxu0 0.0
    %850 = vmatprep.subr.mxu0 0.0
    %851 = vmatpush1.msra.mxu0 0.0
    %852 = vmatprep.subr.mxu0 0.0
    %853 = vmatpush1.msra.mxu0 0.0
    %854 = vmatprep.subr.mxu0 0.0
    %855 = vmatpush1.msra.mxu0 0.0
    %856 = vmatprep.subr.mxu0 0.0
    %857 = vmatpush1.msra.mxu0 0.0
    %858 = vmatprep.subr.mxu0 0.0
    %859 = vmatpush1.msra.mxu0 %v341
    %860 = vmatprep.subr.mxu0 0.0
    %861 = vmatpush1.msra.mxu0 %v340
    %862 = vmatprep.subr.mxu0 0.0
    %863 = vmatpush2.msra.mxu0 0.0
    %864 = vmatprep.subr.mxu0 0.0
    %865 = vmatpush2.msra.mxu0 0.0
    %866 = vmatprep.subr.mxu0 0.0
    %867 = vmatpush2.msra.mxu0 0.0
    %868 = vmatprep.subr.mxu0 0.0
    %869 = vmatpush2.msra.mxu0 0.0
    %870 = vmatprep.subr.mxu0 0.0
    %871 = vmatpush2.msra.mxu0 0.0
    %872 = vmatprep.subr.mxu0 0.0
    %873 = vmatpush2.msra.mxu0 0.0
    %874 = vmatprep.subr.mxu0 0.0
    %875 = vmatpush2.msra.mxu0 0.0
    %876 = vmatprep.subr.mxu0 0.0
    %877 = vmatpush2.msra.mxu0 0.0
    %878 = vmatprep.subr.mxu0 0.0
    %879 = vmatpush2.msra.mxu0 0.0
    %880 = vmatprep.subr.mxu0 0.0
    %881 = vmatpush2.msra.mxu0 0.0
    %882 = vmatprep.subr.mxu0 0.0
    %883 = vmatpush2.msra.mxu0 0.0
    %884 = vmatprep.subr.mxu0 0.0
    %885 = vmatpush2.msra.mxu0 0.0
    %886 = vmatprep.subr.mxu0 0.0
    %887 = vmatpush2.msra.mxu0 0.0
    %888 = vmatprep.subr.mxu0 0.0
    %889 = vmatpush2.msra.mxu0 0.0
    %890 = vmatprep.subr.mxu0 0.0
    %891 = vmatpush2.msra.mxu0 0.0
    %892 = vmatprep.subr.mxu0 0.0
    %893 = vmatpush2.msra.mxu0 0.0
    %894 = vmatprep.mubr.f32.mxu0 0.0
    %895 = vmatmul.mubr.f32.gmra.mxu0 %v825
    %v896 = vpop.f32.mrf.mxu0
    %v897 = vadd.f32 %v816, %v896
    %v898 = vpop.f32.mrf.mxu0
    %899 = vmatprep.mubr.f32.mxu0 0.0
    %900 = vmatmul.mubr.f32.gmra.mxu0 %v828
    %v901 = vpop.f32.mrf.mxu0
    %v902 = vadd.f32 %v821, %v901
    %v903 = vpop.f32.mrf.mxu0
    %904 = vdwg.mxu0
    %v905 = vld [vmem:[#allocation2 + $0x98] sm:$0x1]
    %v906 = vlaneseq
    %v907 = vshrl.u32 %v906, 7
    %v908 = vsub.s32 0, %v907
    %v909 = vrot.slane %v905, %v908
    %v910 = vadd.f32 %v897, %v909
    %v911 = vadd.f32 %v902, %v909
    %v912 = vadd.f32 %v222, %v910
    %v913 = vadd.f32 %v223, %v911
    %v914 = vld [vmem:[#allocation2 + $0x94] sm:$0x1]
    %v915 = vld [vmem:[#allocation2 + $0x95] sm:$0x1]
    %v916 = vsel %vm181, %v912, 0.0
    %917 = vadd.xlane.f32.xlu0 %v916
    %v918 = vpop.xlane.xlu0 %917
    %v919 = vsel %vm181, %v913, 0.0
    %920 = vadd.xlane.f32.xlu0 %v919
    %v921 = vpop.xlane.xlu0 %920
    %v922 = vmul.f32 %v912, %v912
    %v923 = vmul.f32 %v913, %v913
    %v924 = vsel %vm181, %v922, 0.0
    %925 = vadd.xlane.f32.xlu0 %v924
    %v926 = vpop.xlane.xlu0 %925
    %v927 = vsel %vm181, %v923, 0.0
    %928 = vadd.xlane.f32.xlu0 %v927
    %v929 = vpop.xlane.xlu0 %928
    %v930 = vmul.f32 %v918, 0.03125
    %v931 = vmul.f32 %v921, 0.03125
    %v932 = vmul.f32 %v926, 0.03125
    %v933 = vmul.f32 %v929, 0.03125
    %v934 = vmul.f32 %v930, %v930
    %v935 = vmul.f32 %v931, %v931
    %v936 = vsub.f32 %v932, %v934
    %v937 = vsub.f32 %v933, %v935
    %v938 = vsub.f32 %v912, %v930
    %v939 = vsub.f32 %v913, %v931
    %v940 = vadd.f32 %v936, 1e-12
    %v941 = vadd.f32 %v937, 1e-12
    %v942 = vrsqrt.pop %v940
    %v943 = vrsqrt.pop %v941
    %v944 = vmul.f32 %v938, %v942
    %v945 = vmul.f32 %v939, %v943
    %v946 = vlaneseq
    %v947 = vshrl.u32 %v946, 7
    %v948 = vsub.s32 0, %v947
    %v949 = vrot.slane %v914, %v948
    %v950 = vmul.f32 %v944, %v949
    %v951 = vmul.f32 %v945, %v949
    %v952 = vlaneseq
    %v953 = vshrl.u32 %v952, 7
    %v954 = vsub.s32 0, %v953
    %v955 = vrot.slane %v915, %v954
    %v956 = vadd.f32 %v950, %v955
    %v957 = vadd.f32 %v951, %v955
    %v958 = vld [vmem:[#allocation2 + $0xe0] sm:$0xff]
    %v959 = vld [vmem:[#allocation2 + $0xe8] sm:$0xff]
    %v960 = vld [vmem:[#allocation2 + $0xf0] sm:$0xff]
    %v961 = vld [vmem:[#allocation2 + $0xf8] sm:$0xff]
    %v962 = vld [vmem:[#allocation2 + $0x9a] sm:$0x1]
    %v963 = vlaneseq
    %v964 = vshrl.u32 %v963, 7
    %v965 = vsub.s32 0, %v964
    %v966 = vrot.slane %v962, %v965
    %v968 = vsel %vm181, %v956, 0
    %v971 = vsel %vm181, %v957, 0
    %973 = vmatprep.subr.mxu0 0.0
    %974 = vmatpush1.msra.mxu0 0.0
    %975 = vmatprep.subr.mxu0 0.0
    %976 = vmatpush1.msra.mxu0 0.0
    %977 = vmatprep.subr.mxu0 0.0
    %978 = vmatpush1.msra.mxu0 0.0
    %979 = vmatprep.subr.mxu0 0.0
    %980 = vmatpush1.msra.mxu0 0.0
    %981 = vmatprep.subr.mxu0 0.0
    %982 = vmatpush1.msra.mxu0 0.0
    %983 = vmatprep.subr.mxu0 0.0
    %984 = vmatpush1.msra.mxu0 0.0
    %985 = vmatprep.subr.mxu0 0.0
    %986 = vmatpush1.msra.mxu0 0.0
    %987 = vmatprep.subr.mxu0 0.0
    %988 = vmatpush1.msra.mxu0 0.0
    %989 = vmatprep.subr.mxu0 0.0
    %990 = vmatpush1.msra.mxu0 0.0
    %991 = vmatprep.subr.mxu0 0.0
    %992 = vmatpush1.msra.mxu0 0.0
    %993 = vmatprep.subr.mxu0 0.0
    %994 = vmatpush1.msra.mxu0 0.0
    %995 = vmatprep.subr.mxu0 0.0
    %996 = vmatpush1.msra.mxu0 0.0
    %997 = vmatprep.subr.mxu0 0.0
    %998 = vmatpush1.msra.mxu0 %v961
    %999 = vmatprep.subr.mxu0 0.0
    %1000 = vmatpush1.msra.mxu0 %v960
    %1001 = vmatprep.subr.mxu0 0.0
    %1002 = vmatpush1.msra.mxu0 %v959
    %1003 = vmatprep.subr.mxu0 0.0
    %1004 = vmatpush1.msra.mxu0 %v958
    %1005 = vmatprep.subr.mxu0 0.0
    %1006 = vmatpush2.msra.mxu0 0.0
    %1007 = vmatprep.subr.mxu0 0.0
    %1008 = vmatpush2.msra.mxu0 0.0
    %1009 = vmatprep.subr.mxu0 0.0
    %1010 = vmatpush2.msra.mxu0 0.0
    %1011 = vmatprep.subr.mxu0 0.0
    %1012 = vmatpush2.msra.mxu0 0.0
    %1013 = vmatprep.subr.mxu0 0.0
    %1014 = vmatpush2.msra.mxu0 0.0
    %1015 = vmatprep.subr.mxu0 0.0
    %1016 = vmatpush2.msra.mxu0 0.0
    %1017 = vmatprep.subr.mxu0 0.0
    %1018 = vmatpush2.msra.mxu0 0.0
    %1019 = vmatprep.subr.mxu0 0.0
    %1020 = vmatpush2.msra.mxu0 0.0
    %1021 = vmatprep.subr.mxu0 0.0
    %1022 = vmatpush2.msra.mxu0 0.0
    %1023 = vmatprep.subr.mxu0 0.0
    %1024 = vmatpush2.msra.mxu0 0.0
    %1025 = vmatprep.subr.mxu0 0.0
    %1026 = vmatpush2.msra.mxu0 0.0
    %1027 = vmatprep.subr.mxu0 0.0
    %1028 = vmatpush2.msra.mxu0 0.0
    %1029 = vmatprep.subr.mxu0 0.0
    %1030 = vmatpush2.msra.mxu0 0.0
    %1031 = vmatprep.subr.mxu0 0.0
    %1032 = vmatpush2.msra.mxu0 0.0
    %1033 = vmatprep.subr.mxu0 0.0
    %1034 = vmatpush2.msra.mxu0 0.0
    %1035 = vmatprep.subr.mxu0 0.0
    %1036 = vmatpush2.msra.mxu0 0.0
    %1037 = vmatprep.mubr.f32.mxu0 0.0
    %1038 = vmatmul.mubr.f32.gmra.mxu0 %v968
    %v1039 = vpop.f32.mrf.mxu0
    %v1040 = vadd.f32 %v966, %v1039
    %v1041 = vpop.f32.mrf.mxu0
    %1042 = vmatprep.mubr.f32.mxu0 0.0
    %1043 = vmatmul.mubr.f32.gmra.mxu0 %v971
    %v1044 = vpop.f32.mrf.mxu0
    %v1045 = vadd.f32 %v966, %v1044
    %v1046 = vpop.f32.mrf.mxu0
    %1047 = vdwg.mxu0
    %v1048 = vmul.f32 %v1040, 0.5
    %v1049 = vmul.f32 %v1045, 0.5
    %v1050 = vmul.f32 %v1040, 0.044715
    %v1051 = vmul.f32 %v1045, 0.044715
    %v1052 = vmul.f32 %v1050, %v1040
    %v1053 = vmul.f32 %v1051, %v1045
    %v1054 = vmul.f32 %v1052, %v1040
    %v1055 = vmul.f32 %v1053, %v1045
    %v1056 = vadd.f32 %v1040, %v1054
    %v1057 = vadd.f32 %v1045, %v1055
    %v1058 = vmul.f32 %v1056, 0.7978846
    %v1059 = vmul.f32 %v1057, 0.7978846
    %v1060 = vtanh.pop %v1058
    %v1061 = vtanh.pop %v1059
    %v1062 = vadd.f32 %v1060, 1.0
    %v1063 = vadd.f32 %v1061, 1.0
    %v1064 = vmul.f32 %v1048, %v1062
    %v1065 = vmul.f32 %v1049, %v1063
    %v1066 = vld [vmem:[#allocation2 + $0x100] sm:$0xff]
    %v1067 = vld [vmem:[#allocation2 + $0x108] sm:$0xff]
    %v1068 = vld [vmem:[#allocation2 + $0x110] sm:$0xff]
    %v1069 = vld [vmem:[#allocation2 + $0x118] sm:$0xff]
    %v1070 = vld [vmem:[#allocation2 + $0x120] sm:$0xff]
    %v1071 = vld [vmem:[#allocation2 + $0x128] sm:$0xff]
    %v1072 = vld [vmem:[#allocation2 + $0x130] sm:$0xff]
    %v1073 = vld [vmem:[#allocation2 + $0x138] sm:$0xff]
    %v1074 = vld [vmem:[#allocation2 + $0x140] sm:$0xff]
    %v1075 = vld [vmem:[#allocation2 + $0x148] sm:$0xff]
    %v1076 = vld [vmem:[#allocation2 + $0x150] sm:$0xff]
    %v1077 = vld [vmem:[#allocation2 + $0x158] sm:$0xff]
    %v1078 = vld [vmem:[#allocation2 + $0x160] sm:$0xff]
    %v1079 = vld [vmem:[#allocation2 + $0x168] sm:$0xff]
    %v1080 = vld [vmem:[#allocation2 + $0x170] sm:$0xff]
    %v1081 = vld [vmem:[#allocation2 + $0x178] sm:$0xff]
    %v1082 = vld [vmem:[#allocation2 + $0x9b] sm:$0x1]
    %v1083 = vlaneseq
    %v1084 = vshrl.u32 %v1083, 7
    %v1085 = vsub.s32 0, %v1084
    %v1086 = vrot.slane %v1082, %v1085
    %1087 = vmatprep.subr.mxu0 0.0
    %1088 = vmatpush1.msra.mxu0 %v1081
    %1089 = vmatprep.subr.mxu0 0.0
    %1090 = vmatpush1.msra.mxu0 %v1080
    %1091 = vmatprep.subr.mxu0 0.0
    %1092 = vmatpush1.msra.mxu0 %v1079
    %1093 = vmatprep.subr.mxu0 0.0
    %1094 = vmatpush1.msra.mxu0 %v1078
    %1095 = vmatprep.subr.mxu0 0.0
    %1096 = vmatpush1.msra.mxu0 %v1077
    %1097 = vmatprep.subr.mxu0 0.0
    %1098 = vmatpush1.msra.mxu0 %v1076
    %1099 = vmatprep.subr.mxu0 0.0
    %1100 = vmatpush1.msra.mxu0 %v1075
    %1101 = vmatprep.subr.mxu0 0.0
    %1102 = vmatpush1.msra.mxu0 %v1074
    %1103 = vmatprep.subr.mxu0 0.0
    %1104 = vmatpush1.msra.mxu0 %v1073
    %1105 = vmatprep.subr.mxu0 0.0
    %1106 = vmatpush1.msra.mxu0 %v1072
    %1107 = vmatprep.subr.mxu0 0.0
    %1108 = vmatpush1.msra.mxu0 %v1071
    %1109 = vmatprep.subr.mxu0 0.0
    %1110 = vmatpush1.msra.mxu0 %v1070
    %1111 = vmatprep.subr.mxu0 0.0
    %1112 = vmatpush1.msra.mxu0 %v1069
    %1113 = vmatprep.subr.mxu0 0.0
    %1114 = vmatpush1.msra.mxu0 %v1068
    %1115 = vmatprep.subr.mxu0 0.0
    %1116 = vmatpush1.msra.mxu0 %v1067
    %1117 = vmatprep.subr.mxu0 0.0
    %1118 = vmatpush1.msra.mxu0 %v1066
    %1119 = vmatprep.subr.mxu0 0.0
    %1120 = vmatpush2.msra.mxu0 0.0
    %1121 = vmatprep.subr.mxu0 0.0
    %1122 = vmatpush2.msra.mxu0 0.0
    %1123 = vmatprep.subr.mxu0 0.0
    %1124 = vmatpush2.msra.mxu0 0.0
    %1125 = vmatprep.subr.mxu0 0.0
    %1126 = vmatpush2.msra.mxu0 0.0
    %1127 = vmatprep.subr.mxu0 0.0
    %1128 = vmatpush2.msra.mxu0 0.0
    %1129 = vmatprep.subr.mxu0 0.0
    %1130 = vmatpush2.msra.mxu0 0.0
    %1131 = vmatprep.subr.mxu0 0.0
    %1132 = vmatpush2.msra.mxu0 0.0
    %1133 = vmatprep.subr.mxu0 0.0
    %1134 = vmatpush2.msra.mxu0 0.0
    %1135 = vmatprep.subr.mxu0 0.0
    %1136 = vmatpush2.msra.mxu0 0.0
    %1137 = vmatprep.subr.mxu0 0.0
    %1138 = vmatpush2.msra.mxu0 0.0
    %1139 = vmatprep.subr.mxu0 0.0
    %1140 = vmatpush2.msra.mxu0 0.0
    %1141 = vmatprep.subr.mxu0 0.0
    %1142 = vmatpush2.msra.mxu0 0.0
    %1143 = vmatprep.subr.mxu0 0.0
    %1144 = vmatpush2.msra.mxu0 0.0
    %1145 = vmatprep.subr.mxu0 0.0
    %1146 = vmatpush2.msra.mxu0 0.0
    %1147 = vmatprep.subr.mxu0 0.0
    %1148 = vmatpush2.msra.mxu0 0.0
    %1149 = vmatprep.subr.mxu0 0.0
    %1150 = vmatpush2.msra.mxu0 0.0
    %1151 = vmatprep.mubr.f32.mxu0 0.0
    %1152 = vmatmul.mubr.f32.gmra.mxu0 %v1064
    %v1153 = vpop.f32.mrf.mxu0
    %v1154 = vadd.f32 %v1086, %v1153
    %v1155 = vpop.f32.mrf.mxu0
    %1156 = vmatprep.mubr.f32.mxu0 0.0
    %1157 = vmatmul.mubr.f32.gmra.mxu0 %v1065
    %v1158 = vpop.f32.mrf.mxu0
    %v1159 = vpop.f32.mrf.mxu0
    %1160 = vdwg.mxu0
    %v1161 = vadd.f32 %v956, %v1154
    %v1162 = vld [vmem:[#allocation2 + $0x96] sm:$0x1]
    %v1163 = vld [vmem:[#allocation2 + $0x97] sm:$0x1]
    %v1164 = vsel %vm181, %v1161, 0.0
    %1165 = vadd.xlane.f32.xlu0 %v1164
    %v1166 = vpop.xlane.xlu0 %1165
    %v1167 = vmul.f32 %v1161, %v1161
    %v1168 = vsel %vm181, %v1167, 0.0
    %1169 = vadd.xlane.f32.xlu0 %v1168
    %v1170 = vpop.xlane.xlu0 %1169
    %v1171 = vmul.f32 %v1166, 0.03125
    %v1172 = vmul.f32 %v1170, 0.03125
    %v1173 = vmul.f32 %v1171, %v1171
    %v1174 = vsub.f32 %v1172, %v1173
    %v1175 = vsub.f32 %v1161, %v1171
    %v1176 = vadd.f32 %v1174, 1e-12
    %v1177 = vrsqrt.pop %v1176
    %v1178 = vmul.f32 %v1175, %v1177
    %v1179 = vlaneseq
    %v1180 = vshrl.u32 %v1179, 7
    %v1181 = vsub.s32 0, %v1180
    %v1182 = vrot.slane %v1162, %v1181
    %v1183 = vmul.f32 %v1178, %v1182
    %v1184 = vlaneseq
    %v1185 = vshrl.u32 %v1184, 7
    %v1186 = vsub.s32 0, %v1185
    %v1187 = vrot.slane %v1163, %v1186
    %v1188 = vadd.f32 %v1183, %v1187
    %v1189 = vld [vmem:[#allocation2 + $0x180] sm:$0xff]
    %v1190 = vld [vmem:[#allocation2 + $0x188] sm:$0xff]
    %v1191 = vld [vmem:[#allocation2 + $0x190] sm:$0xff]
    %v1192 = vld [vmem:[#allocation2 + $0x198] sm:$0xff]
    %v1193 = vld [vmem:[#allocation2 + $0x9c] sm:$0x1]
    %v1194 = vlaneseq
    %v1195 = vshrl.u32 %v1194, 7
    %v1196 = vsub.s32 0, %v1195
    %v1197 = vrot.slane %v1193, %v1196
    %v1199 = vsel %vm181, %v1188, 0
    %1201 = vmatprep.subr.mxu0 0.0
    %1202 = vmatpush1.msra.mxu0 0.0
    %1203 = vmatprep.subr.mxu0 0.0
    %1204 = vmatpush1.msra.mxu0 0.0
    %1205 = vmatprep.subr.mxu0 0.0
    %1206 = vmatpush1.msra.mxu0 0.0
    %1207 = vmatprep.subr.mxu0 0.0
    %1208 = vmatpush1.msra.mxu0 0.0
    %1209 = vmatprep.subr.mxu0 0.0
    %1210 = vmatpush1.msra.mxu0 0.0
    %1211 = vmatprep.subr.mxu0 0.0
    %1212 = vmatpush1.msra.mxu0 0.0
    %1213 = vmatprep.subr.mxu0 0.0
    %1214 = vmatpush1.msra.mxu0 0.0
    %1215 = vmatprep.subr.mxu0 0.0
    %1216 = vmatpush1.msra.mxu0 0.0
    %1217 = vmatprep.subr.mxu0 0.0
    %1218 = vmatpush1.msra.mxu0 0.0
    %1219 = vmatprep.subr.mxu0 0.0
    %1220 = vmatpush1.msra.mxu0 0.0
    %1221 = vmatprep.subr.mxu0 0.0
    %1222 = vmatpush1.msra.mxu0 0.0
    %1223 = vmatprep.subr.mxu0 0.0
    %1224 = vmatpush1.msra.mxu0 0.0
    %1225 = vmatprep.subr.mxu0 0.0
    %1226 = vmatpush1.msra.mxu0 %v1192
    %1227 = vmatprep.subr.mxu0 0.0
    %1228 = vmatpush1.msra.mxu0 %v1191
    %1229 = vmatprep.subr.mxu0 0.0
    %1230 = vmatpush1.msra.mxu0 %v1190
    %1231 = vmatprep.subr.mxu0 0.0
    %1232 = vmatpush1.msra.mxu0 %v1189
    %1233 = vmatprep.subr.mxu0 0.0
    %1234 = vmatpush2.msra.mxu0 0.0
    %1235 = vmatprep.subr.mxu0 0.0
    %1236 = vmatpush2.msra.mxu0 0.0
    %1237 = vmatprep.subr.mxu0 0.0
    %1238 = vmatpush2.msra.mxu0 0.0
    %1239 = vmatprep.subr.mxu0 0.0
    %1240 = vmatpush2.msra.mxu0 0.0
    %1241 = vmatprep.subr.mxu0 0.0
    %1242 = vmatpush2.msra.mxu0 0.0
    %1243 = vmatprep.subr.mxu0 0.0
    %1244 = vmatpush2.msra.mxu0 0.0
    %1245 = vmatprep.subr.mxu0 0.0
    %1246 = vmatpush2.msra.mxu0 0.0
    %1247 = vmatprep.subr.mxu0 0.0
    %1248 = vmatpush2.msra.mxu0 0.0
    %1249 = vmatprep.subr.mxu0 0.0
    %1250 = vmatpush2.msra.mxu0 0.0
    %1251 = vmatprep.subr.mxu0 0.0
    %1252 = vmatpush2.msra.mxu0 0.0
    %1253 = vmatprep.subr.mxu0 0.0
    %1254 = vmatpush2.msra.mxu0 0.0
    %1255 = vmatprep.subr.mxu0 0.0
    %1256 = vmatpush2.msra.mxu0 0.0
    %1257 = vmatprep.subr.mxu0 0.0
    %1258 = vmatpush2.msra.mxu0 0.0
    %1259 = vmatprep.subr.mxu0 0.0
    %1260 = vmatpush2.msra.mxu0 0.0
    %1261 = vmatprep.subr.mxu0 0.0
    %1262 = vmatpush2.msra.mxu0 0.0
    %1263 = vmatprep.subr.mxu0 0.0
    %1264 = vmatpush2.msra.mxu0 0.0
    %1265 = vmatprep.mubr.f32.mxu0 0.0
    %1266 = vmatmul.mubr.f32.gmra.mxu0 %v1199
    %v1267 = vpop.f32.mrf.mxu0
    %v1268 = vadd.f32 %v1197, %v1267
    %v1269 = vpop.f32.mrf.mxu0
    %1270 = vdwg.mxu0
    %v1271 = vmul.f32 %v1268, 0.5
    %v1272 = vmul.f32 %v1268, 0.044715
    %v1273 = vmul.f32 %v1272, %v1268
    %v1274 = vmul.f32 %v1273, %v1268
    %v1275 = vadd.f32 %v1268, %v1274
    %v1276 = vmul.f32 %v1275, 0.7978846
    %v1277 = vtanh.pop %v1276
    %v1278 = vadd.f32 %v1277, 1.0
    %v1279 = vmul.f32 %v1271, %v1278
    %v1280 = vld [vmem:[#allocation2 + $0x1a0] sm:$0xff]
    %v1281 = vld [vmem:[#allocation2 + $0x1a8] sm:$0xff]
    %v1282 = vld [vmem:[#allocation2 + $0x1b0] sm:$0xff]
    %v1283 = vld [vmem:[#allocation2 + $0x1b8] sm:$0xff]
    %v1284 = vld [vmem:[#allocation2 + $0x9d] sm:$0x1]
    %v1285 = vlaneseq
    %v1286 = vshrl.u32 %v1285, 7
    %v1287 = vsub.s32 0, %v1286
    %v1288 = vrot.slane %v1284, %v1287
    %v1290 = vsel %vm181, %v1279, 0
    %1292 = vmatprep.subr.mxu0 0.0
    %1293 = vmatpush1.msra.mxu0 0.0
    %1294 = vmatprep.subr.mxu0 0.0
    %1295 = vmatpush1.msra.mxu0 0.0
    %1296 = vmatprep.subr.mxu0 0.0
    %1297 = vmatpush1.msra.mxu0 0.0
    %1298 = vmatprep.subr.mxu0 0.0
    %1299 = vmatpush1.msra.mxu0 0.0
    %1300 = vmatprep.subr.mxu0 0.0
    %1301 = vmatpush1.msra.mxu0 0.0
    %1302 = vmatprep.subr.mxu0 0.0
    %1303 = vmatpush1.msra.mxu0 0.0
    %1304 = vmatprep.subr.mxu0 0.0
    %1305 = vmatpush1.msra.mxu0 0.0
    %1306 = vmatprep.subr.mxu0 0.0
    %1307 = vmatpush1.msra.mxu0 0.0
    %1308 = vmatprep.subr.mxu0 0.0
    %1309 = vmatpush1.msra.mxu0 0.0
    %1310 = vmatprep.subr.mxu0 0.0
    %1311 = vmatpush1.msra.mxu0 0.0
    %1312 = vmatprep.subr.mxu0 0.0
    %1313 = vmatpush1.msra.mxu0 0.0
    %1314 = vmatprep.subr.mxu0 0.0
    %1315 = vmatpush1.msra.mxu0 0.0
    %1316 = vmatprep.subr.mxu0 0.0
    %1317 = vmatpush1.msra.mxu0 %v1283
    %1318 = vmatprep.subr.mxu0 0.0
    %1319 = vmatpush1.msra.mxu0 %v1282
    %1320 = vmatprep.subr.mxu0 0.0
    %1321 = vmatpush1.msra.mxu0 %v1281
    %1322 = vmatprep.subr.mxu0 0.0
    %1323 = vmatpush1.msra.mxu0 %v1280
    %1324 = vmatprep.subr.mxu0 0.0
    %1325 = vmatpush2.msra.mxu0 0.0
    %1326 = vmatprep.subr.mxu0 0.0
    %1327 = vmatpush2.msra.mxu0 0.0
    %1328 = vmatprep.subr.mxu0 0.0
    %1329 = vmatpush2.msra.mxu0 0.0
    %1330 = vmatprep.subr.mxu0 0.0
    %1331 = vmatpush2.msra.mxu0 0.0
    %1332 = vmatprep.subr.mxu0 0.0
    %1333 = vmatpush2.msra.mxu0 0.0
    %1334 = vmatprep.subr.mxu0 0.0
    %1335 = vmatpush2.msra.mxu0 0.0
    %1336 = vmatprep.subr.mxu0 0.0
    %1337 = vmatpush2.msra.mxu0 0.0
    %1338 = vmatprep.subr.mxu0 0.0
    %1339 = vmatpush2.msra.mxu0 0.0
    %1340 = vmatprep.subr.mxu0 0.0
    %1341 = vmatpush2.msra.mxu0 0.0
    %1342 = vmatprep.subr.mxu0 0.0
    %1343 = vmatpush2.msra.mxu0 0.0
    %1344 = vmatprep.subr.mxu0 0.0
    %1345 = vmatpush2.msra.mxu0 0.0
    %1346 = vmatprep.subr.mxu0 0.0
    %1347 = vmatpush2.msra.mxu0 0.0
    %1348 = vmatprep.subr.mxu0 0.0
    %1349 = vmatpush2.msra.mxu0 0.0
    %1350 = vmatprep.subr.mxu0 0.0
    %1351 = vmatpush2.msra.mxu0 0.0
    %1352 = vmatprep.subr.mxu0 0.0
    %1353 = vmatpush2.msra.mxu0 0.0
    %1354 = vmatprep.subr.mxu0 0.0
    %1355 = vmatpush2.msra.mxu0 0.0
    %1356 = vmatprep.mubr.f32.mxu0 0.0
    %1357 = vmatmul.mubr.f32.gmra.mxu0 %v1290
    %v1358 = vpop.f32.mrf.mxu0
    %v1359 = vadd.f32 %v1288, %v1358
    %v1360 = vpop.f32.mrf.mxu0
    %1361 = vdwg.mxu0
    %1362 = vst [vmem:[#allocation5] sm:$0x3] %v1359
    // Predicated region
    $region18: #{classification_model_forward.1} parent=1 // pred_check
      _
    $region19: #{classification_model_forward.1} parent=1 // pred_check_branch
      %1364 = sbr.rel (0) target = $region21
    $region20: #{classification_model_forward.1} parent=1 // pred_region
      %s1366 = ssub.s32 32, 32
      %1367 = vsyncadd [#allocation4], %s1366
      %s1369 = sshll.u32 [#allocation5], 4
      %s1370 = int_to_ptr.vmem [resolvable:$true] %s1369
      %1372 = dma.vmem_to_hbm [thread:$0]  %s1370, 32, %s3, [#allocation4]
    $region21: #{classification_model_forward.1} parent=1 // pred_fallthru
      _
    // Predicated region
    $region22: #{classification_model_forward.1} parent=1 // pred_check
      _
    $region23: #{classification_model_forward.1} parent=1 // pred_check_branch
      %1374 = sbr.rel (0) target = $region25
    $region24: #{classification_model_forward.1} parent=1 // pred_region
      %1375 = dma.done [#allocation4], 32
    $region25: #{classification_model_forward.1} parent=1 // pred_fallthru
      _
    %1376 = vsyncpa [#allocation3], 1
    %1377 = vsyncpa [#allocation4], 1

</llo_original>
